<compile_context>
chip_gen: v7x
topology: tpu7x:2x2x1
jax: 0.10.0
libtpu: 0.0.40
codegen_flags: <defaults>
</compile_context>

<pallas_src>
import functools

import jax
import jax.numpy as jnp
from jax import lax
from jax.experimental import pallas as pl
from jax.experimental.pallas import tpu as pltpu

LRELU_SLOPE = 0.1
BN_EPS = 1e-5
LANE = 128


def _leaky(x):
    return jnp.where(x > 0, x, LRELU_SLOPE * x)


def _round_up(v, m):
    return (v + m - 1) // m * m


def _vmem_limit_bytes():
    """~3/4 of physical VMEM per generation; safe fallback if query fails."""
    try:
        info = pltpu.get_tpu_info()
        cap = int(getattr(info, "vmem_capacity_bytes", 0) or 0)
        if cap > 0:
            return max(32 * 1024 * 1024, min(cap * 3 // 4, 100 * 1024 * 1024))
    except Exception:
        pass
    return 48 * 1024 * 1024


# ---------------------------------------------------------------------------
# Stage 1: conv_1 + conv_skip as ONE matmul per image (taps folded into the
#          contraction dim), plus per-image partial BatchNorm statistics.
# ---------------------------------------------------------------------------
def _stage1_kernel(x_ref, w_ref, ycat_ref, stats_ref, *,
                   ksize, stride, Ho, Wo, Cinp, Coutp):
    """x_ref:     (1, Hp, Wp, Cinp)            padded lane-dense NHWC image
       w_ref:     (k*k*Cinp, 2*Coutp)          [conv_1 | conv_skip] weights
       ycat_ref:  (1, Ho, Wo, 2*Coutp)         raw conv outputs
       stats_ref: (1, 2, Coutp)                per-image [sum(y1), sum(y1^2)]
    """
    cols = []
    for ki in range(ksize):
        for kj in range(ksize):
            if stride == 1:
                ri, ci = pl.ds(ki, Ho), pl.ds(kj, Wo)
            else:
                ri = pl.ds(ki, Ho, stride=stride)
                ci = pl.ds(kj, Wo, stride=stride)
            cols.append(x_ref[0, ri, ci, :])                  # (Ho, Wo, Cinp)
    # In-kernel im2col slab: one MXU matmul carries all k*k taps.
    slab = jnp.concatenate(cols, axis=-1).reshape(Ho * Wo, ksize * ksize * Cinp)
    acc = jnp.dot(slab, w_ref[...],
                  preferred_element_type=jnp.float32)         # (Ho*Wo, 2*Coutp)

    ycat_ref[0] = acc.reshape(Ho, Wo, 2 * Coutp).astype(ycat_ref.dtype)

    # BN partial sums on the MXU (frees the XLU / sublane-reduce path).
    y1 = acc[:, :Coutp]
    ones_row = jnp.ones((1, Ho * Wo), jnp.float32)
    s1 = jnp.dot(ones_row, y1, preferred_element_type=jnp.float32)       # (1, Coutp)
    s2 = jnp.dot(ones_row, y1 * y1, preferred_element_type=jnp.float32)  # (1, Coutp)
    stats_ref[0] = jnp.concatenate([s1, s2], axis=0)                     # (2, Coutp)


# ---------------------------------------------------------------------------
# Stage 2: BN-apply + LeakyReLU + 3x3/s1/p1 conv (single matmul) + residual
#          add + LeakyReLU.
# ---------------------------------------------------------------------------
def _stage2_kernel(ycat_ref, w_ref, ab_ref, o_ref, hpad_ref, *, Ho, Wo, Coutp):
    """ycat_ref: (1, Ho, Wo, 2*Coutp)   raw [conv_1 | skip] from stage 1
       w_ref:    (9*Coutp, Coutp)       conv_2 weights, taps in contraction dim
       ab_ref:   (2, Coutp)             folded BN affine: h = leaky(y1*a + b)
       o_ref:    (1, Ho, Wo, Coutp)     final output (f32)
       hpad_ref: (Ho+2, Wo+2, Coutp)    VMEM scratch: zero-bordered activation
    """
    ycat = ycat_ref[0].astype(jnp.float32)                    # (Ho, Wo, 2*Coutp)
    y1 = ycat[:, :, :Coutp]
    yskip = ycat[:, :, Coutp:]

    a = ab_ref[0:1, :].reshape(1, 1, Coutp)
    b = ab_ref[1:2, :].reshape(1, 1, Coutp)
    h = _leaky(y1 * a + b)                                    # (Ho, Wo, Coutp) f32

    # Zero only the 1-pixel border; the interior is fully overwritten next.
    cdt = hpad_ref.dtype
    zrow = jnp.zeros((1, Wo + 2, Coutp), cdt)
    hpad_ref[pl.ds(0, 1), :, :] = zrow
    hpad_ref[pl.ds(Ho + 1, 1), :, :] = zrow
    zcol = jnp.zeros((Ho, 1, Coutp), cdt)
    hpad_ref[pl.ds(1, Ho), pl.ds(0, 1), :] = zcol
    hpad_ref[pl.ds(1, Ho), pl.ds(Wo + 1, 1), :] = zcol
    hpad_ref[pl.ds(1, Ho), pl.ds(1, Wo), :] = h.astype(cdt)

    cols = []
    for ki in range(3):
        for kj in range(3):
            cols.append(hpad_ref[pl.ds(ki, Ho), pl.ds(kj, Wo), :])  # (Ho, Wo, Coutp)
    slab = jnp.concatenate(cols, axis=-1).reshape(Ho * Wo, 9 * Coutp)
    y2 = jnp.dot(slab, w_ref[...],
                 preferred_element_type=jnp.float32)          # (Ho*Wo, Coutp)

    out = _leaky(y2.reshape(Ho, Wo, Coutp) + _leaky(yskip))
    o_ref[0] = out.astype(o_ref.dtype)


# ---------------------------------------------------------------------------
# Wrapper
# ---------------------------------------------------------------------------
def res_conv_block(x, w1, ws, w2, *, stride, padding,
                   compute_dtype=jnp.float32,
                   interstage_dtype=jnp.bfloat16):
    """x: (N, Cin, H, W) f32; torch-layout weights.  Returns (N, Cout, Ho, Wo) f32."""
    N, Cin, H, W = x.shape
    Cout, Cin_w, kh, kw = w1.shape
    assert kh == kw and Cin_w == Cin
    assert ws.shape == w1.shape and w2.shape == (Cout, Cout, 3, 3)
    k = kh
    Ho = (H + 2 * padding - k) // stride + 1
    Wo = (W + 2 * padding - k) // stride + 1
    Hp, Wp = H + 2 * padding, W + 2 * padding
    cdt = jnp.dtype(compute_dtype)
    idt = jnp.dtype(interstage_dtype)

    # Lane-dense channel padding (multiples of 128).
    Cinp = _round_up(Cin, LANE)
    Coutp = _round_up(Cout, LANE)

    # Layout plumbing (one pass each): NCHW -> padded, lane-dense NHWC;
    # torch OIHW weights -> (k*k*Cin_pad, Cout_pad) matmul matrices.
    xp = jnp.pad(x.transpose(0, 2, 3, 1),
                 ((0, 0), (padding, padding), (padding, padding),
                  (0, Cinp - Cin))).astype(cdt)

    def prep_w(w, ci_pad, co_pad):
        whwio = jnp.transpose(w, (2, 3, 1, 0))                # (kh, kw, ci, co)
        _, _, ci, co = whwio.shape
        return jnp.pad(whwio, ((0, 0), (0, 0), (0, ci_pad - ci), (0, co_pad - co)))

    w1m = prep_w(w1, Cinp, Coutp)
    wsm = prep_w(ws, Cinp, Coutp)
    wcat = jnp.concatenate([w1m, wsm], axis=-1)               # (k, k, Cinp, 2*Coutp)
    wcat = wcat.reshape(k * k * Cinp, 2 * Coutp).astype(cdt)
    w2m = prep_w(w2, Coutp, Coutp).reshape(9 * Coutp, Coutp).astype(cdt)

    cparams = pltpu.CompilerParams(dimension_semantics=("parallel",),
                                   vmem_limit_bytes=_vmem_limit_bytes())

    # --- stage 1 ------------------------------------------------------------
    flops1 = 2 * N * Ho * Wo * (k * k * Cinp) * (2 * Coutp)
    bytes1 = int(xp.size * cdt.itemsize + wcat.size * cdt.itemsize
                 + N * Ho * Wo * 2 * Coutp * idt.itemsize + N * 2 * Coutp * 4)
    ycat, stats = pl.pallas_call(
        functools.partial(_stage1_kernel, ksize=k, stride=stride,
                          Ho=Ho, Wo=Wo, Cinp=Cinp, Coutp=Coutp),
        grid=(N,),
        in_specs=[
            pl.BlockSpec((1, Hp, Wp, Cinp), lambda n: (n, 0, 0, 0)),
            pl.BlockSpec((k * k * Cinp, 2 * Coutp), lambda n: (0, 0)),
        ],
        out_specs=(
            pl.BlockSpec((1, Ho, Wo, 2 * Coutp), lambda n: (n, 0, 0, 0)),
            pl.BlockSpec((1, 2, Coutp), lambda n: (n, 0, 0)),
        ),
        out_shape=(
            jax.ShapeDtypeStruct((N, Ho, Wo, 2 * Coutp), idt),
            jax.ShapeDtypeStruct((N, 2, Coutp), jnp.float32),
        ),
        compiler_params=cparams,
        cost_estimate=pl.CostEstimate(flops=flops1, transcendentals=0,
                                      bytes_accessed=bytes1),
    )(xp, wcat)

    # --- global BatchNorm statistics (tiny (N,2,C) reduction, f32) -----------
    count = N * Ho * Wo
    tot = jnp.sum(stats, axis=0)                              # (2, Coutp)
    mean = tot[0] / count
    var = jnp.maximum(tot[1] / count - mean * mean, 0.0)      # clamp cancellation
    inv_std = lax.rsqrt(var + BN_EPS)
    ab = jnp.stack([inv_std, -mean * inv_std], axis=0).astype(jnp.float32)

    # --- stage 2 ------------------------------------------------------------
    flops2 = 2 * N * Ho * Wo * (9 * Coutp) * Coutp
    bytes2 = int(N * Ho * Wo * 2 * Coutp * idt.itemsize + w2m.size * cdt.itemsize
                 + ab.size * 4 + N * Ho * Wo * Coutp * 4)
    out_nhwc = pl.pallas_call(
        functools.partial(_stage2_kernel, Ho=Ho, Wo=Wo, Coutp=Coutp),
        grid=(N,),
        in_specs=[
            pl.BlockSpec((1, Ho, Wo, 2 * Coutp), lambda n: (n, 0, 0, 0)),
            pl.BlockSpec((9 * Coutp, Coutp), lambda n: (0, 0)),
            pl.BlockSpec((2, Coutp), lambda n: (0, 0)),
        ],
        out_specs=pl.BlockSpec((1, Ho, Wo, Coutp), lambda n: (n, 0, 0, 0)),
        out_shape=jax.ShapeDtypeStruct((N, Ho, Wo, Coutp), jnp.float32),
        scratch_shapes=[pltpu.VMEM((Ho + 2, Wo + 2, Coutp), cdt)],
        compiler_params=cparams,
        cost_estimate=pl.CostEstimate(flops=flops2, transcendentals=0,
                                      bytes_accessed=bytes2),
    )(ycat, w2m, ab)

    # Drop padded channels; single layout conversion back to PyTorch's NCHW.
    return out_nhwc[..., :Cout].transpose(0, 3, 1, 2)


# ---------------------------------------------------------------------------
# Pure-JAX reference (for correctness check)
# ---------------------------------------------------------------------------
def ref_forward(x, w1, ws, w2, *, stride, padding):
    dn = ("NCHW", "OIHW", "NCHW")
    y1 = lax.conv_general_dilated(x, w1, (stride, stride),
                                  [(padding, padding), (padding, padding)],
                                  dimension_numbers=dn)
    mean = y1.mean(axis=(0, 2, 3), keepdims=True)
    var = ((y1 - mean) ** 2).mean(axis=(0, 2, 3), keepdims=True)
    h = _leaky((y1 - mean) / jnp.sqrt(var + BN_EPS))
    y2 = lax.conv_general_dilated(h, w2, (1, 1), [(1, 1), (1, 1)],
                                  dimension_numbers=dn)
    s = _leaky(lax.conv_general_dilated(x, ws, (stride, stride),
                                        [(padding, padding), (padding, padding)],
                                        dimension_numbers=dn))
    return _leaky(y2 + s)


if __name__ == "__main__":
    N, Cin, Cout, H, W = 2, 4, 8, 16, 16
    ksize, stride, padding = 3, 1, 1

    key = jax.random.PRNGKey(0)
    k1, k2, k3, k4 = jax.random.split(key, 4)
    x = jax.random.normal(k1, (N, Cin, H, W), jnp.float32)
    # Conv2d bias=False everywhere in the module -> weights only.
    w1 = jax.random.normal(k2, (Cout, Cin, ksize, ksize), jnp.float32) * 0.1
    ws = jax.random.normal(k3, (Cout, Cin, ksize, ksize), jnp.float32) * 0.1
    w2 = jax.random.normal(k4, (Cout, Cout, 3, 3), jnp.float32) * 0.1

    ref = ref_forward(x, w1, ws, w2, stride=stride, padding=padding)

    # Strict check: f32 MXU operands, f32 inter-stage storage.
    out = jax.block_until_ready(
        res_conv_block(x, w1, ws, w2, stride=stride, padding=padding,
                       compute_dtype=jnp.float32,
                       interstage_dtype=jnp.float32))
    assert out.shape == (N, Cout, H, W), out.shape
    assert jnp.allclose(out, ref, atol=1e-4, rtol=1e-4), \
        float(jnp.max(jnp.abs(out - ref)))

    # Default fast path: f32 compute, bf16 inter-stage storage.
    out_fast = jax.block_until_ready(
        res_conv_block(x, w1, ws, w2, stride=stride, padding=padding))
    assert jnp.allclose(out_fast, ref, atol=5e-2, rtol=5e-2), \
        float(jnp.max(jnp.abs(out_fast - ref)))

    # bf16 MXU operands (v6e/v7x fast path), f32 accumulation + f32 BN math.
    out_bf16 = jax.block_until_ready(
        res_conv_block(x, w1, ws, w2, stride=stride, padding=padding,
                       compute_dtype=jnp.bfloat16,
                       interstage_dtype=jnp.bfloat16))
    assert jnp.allclose(out_bf16, ref, atol=5e-2, rtol=5e-2), \
        float(jnp.max(jnp.abs(out_bf16 - ref)))

    print("KERNEL_OK")
</pallas_src>

<mosaic_0001>
module attributes {stable_mosaic.version = 11 : i64} {
  func.func @_stage1_kernel(%arg0: i32, %arg1: memref<1x18x18x128xf32, #tpu.memory_space<vmem>>, %arg2: memref<1152x256xf32, #tpu.memory_space<vmem>>, %arg3: memref<1x16x16x256xf32, #tpu.memory_space<vmem>>, %arg4: memref<1x2x128xf32, #tpu.memory_space<vmem>>) attributes {dimension_semantics = [#tpu.dimension_semantics<parallel>], iteration_bounds = array<i64: 2>, scalar_prefetch = 0 : i64, scratch_operands = 0 : i64, tpu.core_type = #tpu.core_type<tc>, window_params = [{transform_indices = @transform_0, window_bounds = array<i64: 1, 18, 18, 128>}, {pipeline_mode = #tpu.pipeline_mode<synchronous>, transform_indices = @transform_1, window_bounds = array<i64: 1152, 256>}, {transform_indices = @transform_2, window_bounds = array<i64: 1, 16, 16, 256>}, {transform_indices = @transform_3, window_bounds = array<i64: 1, 2, 128>}]} {
    %c0 = arith.constant 0 : index
    %c0_0 = arith.constant 0 : index
    %c0_1 = arith.constant 0 : index
    %c0_2 = arith.constant 0 : index
    %0 = vector.load %arg1[%c0, %c0_0, %c0_1, %c0_2] : memref<1x18x18x128xf32, #tpu.memory_space<vmem>>, vector<1x16x16x128xf32>
    %1 = vector.shape_cast %0 : vector<1x16x16x128xf32> to vector<16x16x128xf32>
    %c0_3 = arith.constant 0 : index
    %c0_4 = arith.constant 0 : index
    %c1 = arith.constant 1 : index
    %c0_5 = arith.constant 0 : index
    %2 = vector.load %arg1[%c0_3, %c0_4, %c1, %c0_5] : memref<1x18x18x128xf32, #tpu.memory_space<vmem>>, vector<1x16x16x128xf32>
    %3 = vector.shape_cast %2 : vector<1x16x16x128xf32> to vector<16x16x128xf32>
    %c0_6 = arith.constant 0 : index
    %c0_7 = arith.constant 0 : index
    %c2 = arith.constant 2 : index
    %c0_8 = arith.constant 0 : index
    %4 = vector.load %arg1[%c0_6, %c0_7, %c2, %c0_8] : memref<1x18x18x128xf32, #tpu.memory_space<vmem>>, vector<1x16x16x128xf32>
    %5 = vector.shape_cast %4 : vector<1x16x16x128xf32> to vector<16x16x128xf32>
    %c0_9 = arith.constant 0 : index
    %c1_10 = arith.constant 1 : index
    %c0_11 = arith.constant 0 : index
    %c0_12 = arith.constant 0 : index
    %6 = vector.load %arg1[%c0_9, %c1_10, %c0_11, %c0_12] : memref<1x18x18x128xf32, #tpu.memory_space<vmem>>, vector<1x16x16x128xf32>
    %7 = vector.shape_cast %6 : vector<1x16x16x128xf32> to vector<16x16x128xf32>
    %c0_13 = arith.constant 0 : index
    %c1_14 = arith.constant 1 : index
    %c1_15 = arith.constant 1 : index
    %c0_16 = arith.constant 0 : index
    %8 = vector.load %arg1[%c0_13, %c1_14, %c1_15, %c0_16] : memref<1x18x18x128xf32, #tpu.memory_space<vmem>>, vector<1x16x16x128xf32>
    %9 = vector.shape_cast %8 : vector<1x16x16x128xf32> to vector<16x16x128xf32>
    %c0_17 = arith.constant 0 : index
    %c1_18 = arith.constant 1 : index
    %c2_19 = arith.constant 2 : index
    %c0_20 = arith.constant 0 : index
    %10 = vector.load %arg1[%c0_17, %c1_18, %c2_19, %c0_20] : memref<1x18x18x128xf32, #tpu.memory_space<vmem>>, vector<1x16x16x128xf32>
    %11 = vector.shape_cast %10 : vector<1x16x16x128xf32> to vector<16x16x128xf32>
    %c0_21 = arith.constant 0 : index
    %c2_22 = arith.constant 2 : index
    %c0_23 = arith.constant 0 : index
    %c0_24 = arith.constant 0 : index
    %12 = vector.load %arg1[%c0_21, %c2_22, %c0_23, %c0_24] : memref<1x18x18x128xf32, #tpu.memory_space<vmem>>, vector<1x16x16x128xf32>
    %13 = vector.shape_cast %12 : vector<1x16x16x128xf32> to vector<16x16x128xf32>
    %c0_25 = arith.constant 0 : index
    %c2_26 = arith.constant 2 : index
    %c1_27 = arith.constant 1 : index
    %c0_28 = arith.constant 0 : index
    %14 = vector.load %arg1[%c0_25, %c2_26, %c1_27, %c0_28] : memref<1x18x18x128xf32, #tpu.memory_space<vmem>>, vector<1x16x16x128xf32>
    %15 = vector.shape_cast %14 : vector<1x16x16x128xf32> to vector<16x16x128xf32>
    %c0_29 = arith.constant 0 : index
    %c2_30 = arith.constant 2 : index
    %c2_31 = arith.constant 2 : index
    %c0_32 = arith.constant 0 : index
    %16 = vector.load %arg1[%c0_29, %c2_30, %c2_31, %c0_32] : memref<1x18x18x128xf32, #tpu.memory_space<vmem>>, vector<1x16x16x128xf32>
    %17 = vector.shape_cast %16 : vector<1x16x16x128xf32> to vector<16x16x128xf32>
    %18 = tpu.concatenate %1, %3, %5, %7, %9, %11, %13, %15, %17 in 2 : vector<16x16x128xf32>, vector<16x16x128xf32>, vector<16x16x128xf32>, vector<16x16x128xf32>, vector<16x16x128xf32>, vector<16x16x128xf32>, vector<16x16x128xf32>, vector<16x16x128xf32>, vector<16x16x128xf32> -> vector<16x16x1152xf32>
    %19 = vector.shape_cast %18 : vector<16x16x1152xf32> to vector<256x1152xf32>
    %c0_33 = arith.constant 0 : index
    %c0_34 = arith.constant 0 : index
    %20 = vector.load %arg2[%c0_33, %c0_34] : memref<1152x256xf32, #tpu.memory_space<vmem>>, vector<1152x256xf32>
    %cst = arith.constant dense<0.000000e+00> : vector<256x256xf32>
    %21 = tpu.matmul %19, %20, %cst {dimension_numbers = #tpu.dot_dimension_numbers<[1], [0], [0], [1], [0, 0, 1, 1], [], []>} : vector<256x1152xf32>, vector<1152x256xf32>, vector<256x256xf32> -> vector<256x256xf32>
    %22 = vector.shape_cast %21 : vector<256x256xf32> to vector<16x16x256xf32>
    %c0_35 = arith.constant 0 : index
    %c0_36 = arith.constant 0 : index
    %c0_37 = arith.constant 0 : index
    %c0_38 = arith.constant 0 : index
    %23 = vector.load %arg3[%c0_35, %c0_36, %c0_37, %c0_38] : memref<1x16x16x256xf32, #tpu.memory_space<vmem>>, vector<1x16x16x256xf32>
    %24 = vector.shape_cast %23 : vector<1x16x16x256xf32> to vector<16x16x256xf32>
    %25 = vector.shape_cast %22 : vector<16x16x256xf32> to vector<1x16x16x256xf32>
    tpu.vector_store %arg3[%c0_35, %c0_36, %c0_37, %c0_38], %25 {strides = array<i32>} : memref<1x16x16x256xf32, #tpu.memory_space<vmem>>, vector<1x16x16x256xf32>,
    %26 = vector.extract_strided_slice %21 {offsets = [0, 0], sizes = [256, 128], strides = [1, 1]} : vector<256x256xf32> to vector<256x128xf32>
    %cst_39 = arith.constant 1.000000e+00 : f32
    %27 = vector.broadcast %cst_39 : f32 to vector<1x256xf32>
    %cst_40 = arith.constant dense<0.000000e+00> : vector<1x128xf32>
    %28 = tpu.matmul %27, %26, %cst_40 {dimension_numbers = #tpu.dot_dimension_numbers<[1], [0], [0], [1], [0, 0, 1, 1], [], []>} : vector<1x256xf32>, vector<256x128xf32>, vector<1x128xf32> -> vector<1x128xf32>
    %29 = arith.mulf %26, %26 : vector<256x128xf32>
    %cst_41 = arith.constant dense<0.000000e+00> : vector<1x128xf32>
    %30 = tpu.matmul %27, %29, %cst_41 {dimension_numbers = #tpu.dot_dimension_numbers<[1], [0], [0], [1], [0, 0, 1, 1], [], []>} : vector<1x256xf32>, vector<256x128xf32>, vector<1x128xf32> -> vector<1x128xf32>
    %31 = tpu.concatenate %28, %30 in 0 : vector<1x128xf32>, vector<1x128xf32> -> vector<2x128xf32>
    %c0_42 = arith.constant 0 : index
    %c0_43 = arith.constant 0 : index
    %c0_44 = arith.constant 0 : index
    %32 = vector.load %arg4[%c0_42, %c0_43, %c0_44] : memref<1x2x128xf32, #tpu.memory_space<vmem>>, vector<1x2x128xf32>
    %33 = vector.shape_cast %32 : vector<1x2x128xf32> to vector<2x128xf32>
    %34 = vector.shape_cast %31 : vector<2x128xf32> to vector<1x2x128xf32>
    tpu.vector_store %arg4[%c0_42, %c0_43, %c0_44], %34 {strides = array<i32>} : memref<1x2x128xf32, #tpu.memory_space<vmem>>, vector<1x2x128xf32>,
    return
  }
  func.func @transform_0(%arg0: i32) -> (i32, i32, i32, i32) {
    %c0_i32 = arith.constant 0 : i32
    %c0_i32_0 = arith.constant 0 : i32
    %c0_i32_1 = arith.constant 0 : i32
    %c0_i32_2 = arith.constant 0 : i32
    return %arg0, %c0_i32, %c0_i32_0, %c0_i32_1 : i32, i32, i32, i32
  }
  func.func @transform_1(%arg0: i32) -> (i32, i32) {
    %c0_i32 = arith.constant 0 : i32
    %c0_i32_0 = arith.constant 0 : i32
    %c0_i32_1 = arith.constant 0 : i32
    return %c0_i32, %c0_i32_0 : i32, i32
  }
  func.func @transform_2(%arg0: i32) -> (i32, i32, i32, i32) {
    %c0_i32 = arith.constant 0 : i32
    %c0_i32_0 = arith.constant 0 : i32
    %c0_i32_1 = arith.constant 0 : i32
    %c0_i32_2 = arith.constant 0 : i32
    return %arg0, %c0_i32, %c0_i32_0, %c0_i32_1 : i32, i32, i32, i32
  }
  func.func @transform_3(%arg0: i32) -> (i32, i32, i32) {
    %c0_i32 = arith.constant 0 : i32
    %c0_i32_0 = arith.constant 0 : i32
    %c0_i32_1 = arith.constant 0 : i32
    return %arg0, %c0_i32, %c0_i32_0 : i32, i32, i32
  }
}

</mosaic_0001>

<llo_original>
// kernel: tpu_custom_call.1
$region0: #{tpu_custom_call.1}
  #allocation0 [shape = 'u32[]', space=smem, size = 0x4, offset = 0x4, fixed_abs, tag = 'smem constant byte address 0x4 - core index']
  #allocation1 [shape = 'u32[144,128]{1,0:T(1,128)}', space=vmem, size = 0x12000, scoped, tag = 'internal scratch']
  %s0 = inlined_call_operand.vmem [shape: f32[2,18,18,128], index: 0, kind: input, shape index: {}]
  %s1 = inlined_call_operand.hbm [shape: f32[1152,256], index: 1, kind: input, shape index: {}]
  %s2 = inlined_call_operand.hbm [shape: f32[2,16,16,256], index: 2, kind: output, shape index: {0}]
  %s3 = inlined_call_operand.hbm [shape: f32[2,2,128], index: 3, kind: output, shape index: {1}]
  %4 = xla_tuple %s2, %s3
  %s5 = sld [smem:[#allocation0]]
  $region53: #{tpu_custom_call.1} parent=0
    _
  %s7 = ssub.s32 1, %s5
  %s8 = scalar_select 0, %s7, %s5
  $region1: #{tpu_custom_call.1} parent=0
    #allocation2 [shape = 'u8[1179648]{0}', space=vmem, size = 0x120000, scoped, tag = 'input window, operand 1, single buffered']
    #allocation3 [shape = 's32[2]{0}', space=sflag, size = 0x8, scoped, tag = 'scoped memory for tpu_custom_call.1']
    #allocation4 [shape = 's32[2]{0}', space=sflag, size = 0x8, scoped, tag = 'scoped memory for tpu_custom_call.1']
    #allocation5 [shape = 'u8[524288]{0}', space=vmem, size = 0x80000, scoped, tag = 'output window, operand 0']
    #allocation6 [shape = 'u8[2048]{0}', space=vmem, size = 0x800, scoped, tag = 'output window, operand 1']
    #allocation7 [shape = 's32[2]{0}', space=sflag, size = 0x8, scoped, tag = 'scoped memory for tpu_custom_call.1']
    %9 = vsyncpa [#allocation3], 0
    %10 = vsyncpa [#allocation4], 0
    %s11 = scalar_lea.sflag [#allocation4], 1
    %12 = vsyncpa %s11, 0
    %13 = vsyncpa [#allocation7], 0
    %s14 = scalar_lea.sflag [#allocation7], 1
    %15 = vsyncpa %s14, 0
    loop: start=0, step=1, limit=4
    $region2: #{tpu_custom_call.1} parent=1 // loop_pre_header
      _
    $region3: #{tpu_custom_call.1} parent=1 // loop_header
      %s17 = sphi 0, %s21
      %p18 = scmp.ge.s32.totalorder %s17, 4
      %s27 = sphi 0, %s29
      %s30 = sphi 0, %s27
      %s31 = sphi 0, %s30
      %s47 = sphi 0, %s31
      %s51 = sphi 0, %s51
      %s53 = sphi 0, %s51
      %s54 = sphi 0, %s53
      %s68 = sphi 0, %s54
      %s74 = sphi 0, %s76
      %s77 = sphi 0, %s74
      %s78 = sphi 0, %s77
      %s94 = sphi 0, %s78
      %s100 = sphi 0, %s102
      %s103 = sphi 0, %s100
      %s104 = sphi 0, %s103
      %s120 = sphi 0, %s104
    $region4: #{tpu_custom_call.1} parent=1 // loop_header_branch
      %20 = sbr.rel (%p18) target = $region8
    $region5: #{tpu_custom_call.1} parent=1 // loop_body
      %s22 = ssub.s32 %s17, 1
      %s23 = ssub.s32 %s17, 2
      %s24 = sadd.s32 %s17, 1
      %s25 = ssub.s32 %s17, %s24
      %p26 = scmp.eq.s32.totalorder %s25, 0
      %s28 = sadd.s32 %s27, 1
      %s29 = scalar_select %p26, %s27, %s28
      %p32 = pneg %p26
      %p33 = scmp.eq.s32.totalorder %s17, 1
      %p34 = por %p32, %p33
      %p35 = scmp.ne.s32.totalorder %s27, %s30
      %p36 = scmp.eq.s32.totalorder %s17, 0
      %p37 = por %p35, %p36
      %p38 = scmp.ne.s32.totalorder %s27, %s30
      %p39 = scmp.eq.s32.totalorder %s22, 1
      %p40 = por %p38, %p39
      %p41 = scmp.ne.s32.totalorder %s30, %s31
      %p42 = scmp.eq.s32.totalorder %s22, 0
      %p43 = por %p41, %p42
      %p44 = scmp.ne.s32.totalorder %s30, %s31
      %p45 = scmp.eq.s32.totalorder %s23, 1
      %p46 = por %p44, %p45
      %p48 = scmp.ne.s32.totalorder %s31, %s47
      %p49 = scmp.eq.s32.totalorder %s23, 0
      %p50 = por %p48, %p49
      %s52 = sadd.s32 %s51, 1
      %p55 = scmp.eq.s32.totalorder %s17, 1
      %p56 = scmp.ne.s32.totalorder %s51, %s53
      %p57 = scmp.eq.s32.totalorder %s17, 0
      %p58 = por %p56, %p57
      %p59 = scmp.ne.s32.totalorder %s51, %s53
      %p60 = scmp.eq.s32.totalorder %s22, 1
      %p61 = por %p59, %p60
      %p62 = scmp.ne.s32.totalorder %s53, %s54
      %p63 = scmp.eq.s32.totalorder %s22, 0
      %p64 = por %p62, %p63
      %p65 = scmp.ne.s32.totalorder %s53, %s54
      %p66 = scmp.eq.s32.totalorder %s23, 1
      %p67 = por %p65, %p66
      %p69 = scmp.ne.s32.totalorder %s54, %s68
      %p70 = scmp.eq.s32.totalorder %s23, 0
      %p71 = por %p69, %p70
      %s72 = ssub.s32 %s17, %s24
      %p73 = scmp.eq.s32.totalorder %s72, 0
      %s75 = sadd.s32 %s74, 1
      %s76 = scalar_select %p73, %s74, %s75
      %p79 = pneg %p73
      %p80 = scmp.eq.s32.totalorder %s17, 1
      %p81 = por %p79, %p80
      %p82 = scmp.ne.s32.totalorder %s74, %s77
      %p83 = scmp.eq.s32.totalorder %s17, 0
      %p84 = por %p82, %p83
      %p85 = scmp.ne.s32.totalorder %s74, %s77
      %p86 = scmp.eq.s32.totalorder %s22, 1
      %p87 = por %p85, %p86
      %p88 = scmp.ne.s32.totalorder %s77, %s78
      %p89 = scmp.eq.s32.totalorder %s22, 0
      %p90 = por %p88, %p89
      %p91 = scmp.ne.s32.totalorder %s77, %s78
      %p92 = scmp.eq.s32.totalorder %s23, 1
      %p93 = por %p91, %p92
      %p95 = scmp.ne.s32.totalorder %s78, %s94
      %p96 = scmp.eq.s32.totalorder %s23, 0
      %p97 = por %p95, %p96
      %s98 = ssub.s32 %s17, %s24
      %p99 = scmp.eq.s32.totalorder %s98, 0
      %s101 = sadd.s32 %s100, 1
      %s102 = scalar_select %p99, %s100, %s101
      %p105 = pneg %p99
      %p106 = scmp.eq.s32.totalorder %s17, 1
      %p107 = por %p105, %p106
      %p108 = scmp.ne.s32.totalorder %s100, %s103
      %p109 = scmp.eq.s32.totalorder %s17, 0
      %p110 = por %p108, %p109
      %p111 = scmp.ne.s32.totalorder %s100, %s103
      %p112 = scmp.eq.s32.totalorder %s22, 1
      %p113 = por %p111, %p112
      %p114 = scmp.ne.s32.totalorder %s103, %s104
      %p115 = scmp.eq.s32.totalorder %s22, 0
      %p116 = por %p114, %p115
      %p117 = scmp.ne.s32.totalorder %s103, %s104
      %p118 = scmp.eq.s32.totalorder %s23, 1
      %p119 = por %p117, %p118
      %p121 = scmp.ne.s32.totalorder %s104, %s120
      %p122 = scmp.eq.s32.totalorder %s23, 0
      %p123 = por %p121, %p122
      %p124 = scmp.le.s32.totalorder 1, %s17
      %p125 = scmp.lt.s32.totalorder %s17, 3
      %p126 = pnand %p124, %p125
      %p127 = pneg %p126
      // Predicated region
      $region9: #{tpu_custom_call.1} parent=5 // pred_check
        _
      $region10: #{tpu_custom_call.1} parent=5 // pred_check_branch
        %129 = sbr.rel (%p126) target = $region12
      $region11: #{tpu_custom_call.1} parent=5 // pred_region
        %s130 = ssub.s32 %s17, 1
        // Predicated region
        $region13: #{tpu_custom_call.1} parent=11 // pred_check
          %p131 = pneg %p64
        $region14: #{tpu_custom_call.1} parent=11 // pred_check_branch
          %133 = sbr.rel (%p131) target = $region16
        $region15: #{tpu_custom_call.1} parent=11 // pred_region
          %s135 = ssub.s32 36864, 36864
          %136 = vsyncadd [#allocation3], %s135
          %s137 = sshll.u32 [#allocation2], 4
          %s138 = int_to_ptr.vmem [resolvable:$true] %s137
          %143 = dma.hbm_to_vmem [thread:$0]  %s1, 36864, %s138, [#allocation3], 256, 256, 16
        $region16: #{tpu_custom_call.1} parent=11 // pred_fallthru
          _
      $region12: #{tpu_custom_call.1} parent=5 // pred_fallthru
        _
      %p144 = scmp.lt.s32.totalorder %s17, 2
      // Predicated region
      $region17: #{tpu_custom_call.1} parent=5 // pred_check
        %p145 = pneg %p144
      $region18: #{tpu_custom_call.1} parent=5 // pred_check_branch
        %147 = sbr.rel (%p145) target = $region20
      $region19: #{tpu_custom_call.1} parent=5 // pred_region
        // Predicated region
        $region21: #{tpu_custom_call.1} parent=19 // pred_check
          %p148 = pneg %p37
        $region22: #{tpu_custom_call.1} parent=19 // pred_check_branch
          %150 = sbr.rel (%p148) target = $region24
        $region23: #{tpu_custom_call.1} parent=19 // pred_region
          %p151 = scmp.lt.s32.totalorder %s17, 1
          %s152 = scalar_select %p151, %s17, 1
          %s153 = smul.addr %s152, 54
          %s154 = smul.addr %s153, 8
          %s155 = scalar_lea.vmem %s0, %s154
        $region24: #{tpu_custom_call.1} parent=19 // pred_fallthru
          _
      $region20: #{tpu_custom_call.1} parent=5 // pred_fallthru
        _
      %p156 = scmp.le.s32.totalorder 1, %s17
      %p157 = scmp.lt.s32.totalorder %s17, 3
      %p158 = pnand %p156, %p157
      %p159 = pneg %p158
      // Predicated region
      $region25: #{tpu_custom_call.1} parent=5 // pred_check
        _
      $region26: #{tpu_custom_call.1} parent=5 // pred_check_branch
        %161 = sbr.rel (%p158) target = $region28
      $region27: #{tpu_custom_call.1} parent=5 // pred_region
        %s162 = ssub.s32 %s17, 1
        // Predicated region
        $region29: #{tpu_custom_call.1} parent=27 // pred_check
          %p163 = pneg %p64
        $region30: #{tpu_custom_call.1} parent=27 // pred_check_branch
          %165 = sbr.rel (%p163) target = $region32
        $region31: #{tpu_custom_call.1} parent=27 // pred_region
          %166 = dma.done [#allocation3], 36864
        $region32: #{tpu_custom_call.1} parent=27 // pred_fallthru
          _
        %p167 = scmp.lt.s32.totalorder %s22, 1
        %s168 = scalar_select %p167, %s22, 1
        %s169 = smul.addr %s168, 54
        %s170 = smul.addr %s169, 8
        %s171 = scalar_lea.vmem %s0, %s170
        %p172 = pneg %p43
        %p173 = pneg %p40
        %p174 = pneg %p64
        %p175 = pneg %p61
        %p176 = pneg %p90
        %p177 = pneg %p87
        %s178 = sand.u32 %s77, 1
        %s179 = scalar_lea.sflag [#allocation4], %s178
        %s180 = sand.u32 %s77, 1
        %s181 = smul.addr %s180, 512
        %s182 = scalar_lea.vmem [#allocation5], %s181
        %p183 = pneg %p116
        %p184 = pneg %p113
        %s185 = sand.u32 %s103, 1
        %s186 = scalar_lea.sflag [#allocation7], %s185
        %s187 = sand.u32 %s103, 1
        %s188 = smul.addr %s187, 2
        %s189 = scalar_lea.vmem [#allocation6], %s188
        %p190 = scmp.lt.s32.totalorder %s22, 1
        %s191 = scalar_select %p190, %s22, 1
        %s192 = smul.addr %s191, 54
        %s193 = smul.addr %s192, 8
        %s194 = scalar_lea.vmem %s0, %s193
        %v195 = vld [vmem:[%s194] sm:$0xff]
        %v196 = vld [vmem:[%s194 + $0x8] sm:$0xff]
        %v197 = vld [vmem:[%s194 + $0x18] sm:$0xff]
        %v198 = vld [vmem:[%s194 + $0x20] sm:$0xff]
        %v199 = vld [vmem:[%s194 + $0x30] sm:$0xff]
        %v200 = vld [vmem:[%s194 + $0x38] sm:$0xff]
        %v201 = vld [vmem:[%s194 + $0x48] sm:$0xff]
        %v202 = vld [vmem:[%s194 + $0x50] sm:$0xff]
        %v203 = vld [vmem:[%s194 + $0x60] sm:$0xff]
        %v204 = vld [vmem:[%s194 + $0x68] sm:$0xff]
        %v205 = vld [vmem:[%s194 + $0x78] sm:$0xff]
        %v206 = vld [vmem:[%s194 + $0x80] sm:$0xff]
        %v207 = vld [vmem:[%s194 + $0x90] sm:$0xff]
        %v208 = vld [vmem:[%s194 + $0x98] sm:$0xff]
        %v209 = vld [vmem:[%s194 + $0xa8] sm:$0xff]
        %v210 = vld [vmem:[%s194 + $0xb0] sm:$0xff]
        %v211 = vld [vmem:[%s194 + $0xc0] sm:$0xff]
        %v212 = vld [vmem:[%s194 + $0xc8] sm:$0xff]
        %v213 = vld [vmem:[%s194 + $0xd8] sm:$0xff]
        %v214 = vld [vmem:[%s194 + $0xe0] sm:$0xff]
        %v215 = vld [vmem:[%s194 + $0xf0] sm:$0xff]
        %v216 = vld [vmem:[%s194 + $0xf8] sm:$0xff]
        %v217 = vld [vmem:[%s194 + $0x108] sm:$0xff]
        %v218 = vld [vmem:[%s194 + $0x110] sm:$0xff]
        %v219 = vld [vmem:[%s194 + $0x120] sm:$0xff]
        %v220 = vld [vmem:[%s194 + $0x128] sm:$0xff]
        %v221 = vld [vmem:[%s194 + $0x138] sm:$0xff]
        %v222 = vld [vmem:[%s194 + $0x140] sm:$0xff]
        %v223 = vld [vmem:[%s194 + $0x150] sm:$0xff]
        %v224 = vld [vmem:[%s194 + $0x158] sm:$0xff]
        %v225 = vld [vmem:[%s194 + $0x168] sm:$0xff]
        %v226 = vld [vmem:[%s194 + $0x170] sm:$0xff]
        %v227 = vld [vmem:[%s194 + $0x1] sm:$0xff]
        %v228 = vld [vmem:[%s194 + $0x9] sm:$0xff]
        %v229 = vld [vmem:[%s194 + $0x19] sm:$0xff]
        %v230 = vld [vmem:[%s194 + $0x21] sm:$0xff]
        %v231 = vld [vmem:[%s194 + $0x31] sm:$0xff]
        %v232 = vld [vmem:[%s194 + $0x39] sm:$0xff]
        %v233 = vld [vmem:[%s194 + $0x49] sm:$0xff]
        %v234 = vld [vmem:[%s194 + $0x51] sm:$0xff]
        %v235 = vld [vmem:[%s194 + $0x61] sm:$0xff]
        %v236 = vld [vmem:[%s194 + $0x69] sm:$0xff]
        %v237 = vld [vmem:[%s194 + $0x79] sm:$0xff]
        %v238 = vld [vmem:[%s194 + $0x81] sm:$0xff]
        %v239 = vld [vmem:[%s194 + $0x91] sm:$0xff]
        %v240 = vld [vmem:[%s194 + $0x99] sm:$0xff]
        %v241 = vld [vmem:[%s194 + $0xa9] sm:$0xff]
        %v242 = vld [vmem:[%s194 + $0xb1] sm:$0xff]
        %v243 = vld [vmem:[%s194 + $0xc1] sm:$0xff]
        %v244 = vld [vmem:[%s194 + $0xc9] sm:$0xff]
        %v245 = vld [vmem:[%s194 + $0xd9] sm:$0xff]
        %v246 = vld [vmem:[%s194 + $0xe1] sm:$0xff]
        %v247 = vld [vmem:[%s194 + $0xf1] sm:$0xff]
        %v248 = vld [vmem:[%s194 + $0xf9] sm:$0xff]
        %v249 = vld [vmem:[%s194 + $0x109] sm:$0xff]
        %v250 = vld [vmem:[%s194 + $0x111] sm:$0xff]
        %v251 = vld [vmem:[%s194 + $0x121] sm:$0xff]
        %v252 = vld [vmem:[%s194 + $0x129] sm:$0xff]
        %v253 = vld [vmem:[%s194 + $0x139] sm:$0xff]
        %v254 = vld [vmem:[%s194 + $0x141] sm:$0xff]
        %v255 = vld [vmem:[%s194 + $0x151] sm:$0xff]
        %v256 = vld [vmem:[%s194 + $0x159] sm:$0xff]
        %v257 = vld [vmem:[%s194 + $0x169] sm:$0xff]
        %v258 = vld [vmem:[%s194 + $0x171] sm:$0xff]
        %v259 = vld [vmem:[%s194 + $0x2] sm:$0xff]
        %v260 = vld [vmem:[%s194 + $0xa] sm:$0xff]
        %v261 = vld [vmem:[%s194 + $0x1a] sm:$0xff]
        %v262 = vld [vmem:[%s194 + $0x22] sm:$0xff]
        %v263 = vld [vmem:[%s194 + $0x32] sm:$0xff]
        %v264 = vld [vmem:[%s194 + $0x3a] sm:$0xff]
        %v265 = vld [vmem:[%s194 + $0x4a] sm:$0xff]
        %v266 = vld [vmem:[%s194 + $0x52] sm:$0xff]
        %v267 = vld [vmem:[%s194 + $0x62] sm:$0xff]
        %v268 = vld [vmem:[%s194 + $0x6a] sm:$0xff]
        %v269 = vld [vmem:[%s194 + $0x7a] sm:$0xff]
        %v270 = vld [vmem:[%s194 + $0x82] sm:$0xff]
        %v271 = vld [vmem:[%s194 + $0x92] sm:$0xff]
        %v272 = vld [vmem:[%s194 + $0x9a] sm:$0xff]
        %v273 = vld [vmem:[%s194 + $0xaa] sm:$0xff]
        %v274 = vld [vmem:[%s194 + $0xb2] sm:$0xff]
        %v275 = vld [vmem:[%s194 + $0xc2] sm:$0xff]
        %v276 = vld [vmem:[%s194 + $0xca] sm:$0xff]
        %v277 = vld [vmem:[%s194 + $0xda] sm:$0xff]
        %v278 = vld [vmem:[%s194 + $0xe2] sm:$0xff]
        %v279 = vld [vmem:[%s194 + $0xf2] sm:$0xff]
        %v280 = vld [vmem:[%s194 + $0xfa] sm:$0xff]
        %v281 = vld [vmem:[%s194 + $0x10a] sm:$0xff]
        %v282 = vld [vmem:[%s194 + $0x112] sm:$0xff]
        %v283 = vld [vmem:[%s194 + $0x122] sm:$0xff]
        %v284 = vld [vmem:[%s194 + $0x12a] sm:$0xff]
        %v285 = vld [vmem:[%s194 + $0x13a] sm:$0xff]
        %v286 = vld [vmem:[%s194 + $0x142] sm:$0xff]
        %v287 = vld [vmem:[%s194 + $0x152] sm:$0xff]
        %v288 = vld [vmem:[%s194 + $0x15a] sm:$0xff]
        %v289 = vld [vmem:[%s194 + $0x16a] sm:$0xff]
        %v290 = vld [vmem:[%s194 + $0x172] sm:$0xff]
        %s291 = scalar_lea.vmem %s194, 24
        %v292 = vld [vmem:[%s291] sm:$0xff]
        %v293 = vld [vmem:[%s291 + $0x8] sm:$0xff]
        %v294 = vld [vmem:[%s291 + $0x18] sm:$0xff]
        %v295 = vld [vmem:[%s291 + $0x20] sm:$0xff]
        %v296 = vld [vmem:[%s291 + $0x30] sm:$0xff]
        %v297 = vld [vmem:[%s291 + $0x38] sm:$0xff]
        %v298 = vld [vmem:[%s291 + $0x48] sm:$0xff]
        %v299 = vld [vmem:[%s291 + $0x50] sm:$0xff]
        %v300 = vld [vmem:[%s291 + $0x60] sm:$0xff]
        %v301 = vld [vmem:[%s291 + $0x68] sm:$0xff]
        %v302 = vld [vmem:[%s291 + $0x78] sm:$0xff]
        %v303 = vld [vmem:[%s291 + $0x80] sm:$0xff]
        %v304 = vld [vmem:[%s291 + $0x90] sm:$0xff]
        %v305 = vld [vmem:[%s291 + $0x98] sm:$0xff]
        %v306 = vld [vmem:[%s291 + $0xa8] sm:$0xff]
        %v307 = vld [vmem:[%s291 + $0xb0] sm:$0xff]
        %v308 = vld [vmem:[%s291 + $0xc0] sm:$0xff]
        %v309 = vld [vmem:[%s291 + $0xc8] sm:$0xff]
        %v310 = vld [vmem:[%s291 + $0xd8] sm:$0xff]
        %v311 = vld [vmem:[%s291 + $0xe0] sm:$0xff]
        %v312 = vld [vmem:[%s291 + $0xf0] sm:$0xff]
        %v313 = vld [vmem:[%s291 + $0xf8] sm:$0xff]
        %v314 = vld [vmem:[%s291 + $0x108] sm:$0xff]
        %v315 = vld [vmem:[%s291 + $0x110] sm:$0xff]
        %v316 = vld [vmem:[%s291 + $0x120] sm:$0xff]
        %v317 = vld [vmem:[%s291 + $0x128] sm:$0xff]
        %v318 = vld [vmem:[%s291 + $0x138] sm:$0xff]
        %v319 = vld [vmem:[%s291 + $0x140] sm:$0xff]
        %v320 = vld [vmem:[%s291 + $0x150] sm:$0xff]
        %v321 = vld [vmem:[%s291 + $0x158] sm:$0xff]
        %v322 = vld [vmem:[%s291 + $0x168] sm:$0xff]
        %v323 = vld [vmem:[%s291 + $0x170] sm:$0xff]
        %v324 = vld [vmem:[%s291 + $0x1] sm:$0xff]
        %v325 = vld [vmem:[%s291 + $0x9] sm:$0xff]
        %v326 = vld [vmem:[%s291 + $0x19] sm:$0xff]
        %v327 = vld [vmem:[%s291 + $0x21] sm:$0xff]
        %v328 = vld [vmem:[%s291 + $0x31] sm:$0xff]
        %v329 = vld [vmem:[%s291 + $0x39] sm:$0xff]
        %v330 = vld [vmem:[%s291 + $0x49] sm:$0xff]
        %v331 = vld [vmem:[%s291 + $0x51] sm:$0xff]
        %v332 = vld [vmem:[%s291 + $0x61] sm:$0xff]
        %v333 = vld [vmem:[%s291 + $0x69] sm:$0xff]
        %v334 = vld [vmem:[%s291 + $0x79] sm:$0xff]
        %v335 = vld [vmem:[%s291 + $0x81] sm:$0xff]
        %v336 = vld [vmem:[%s291 + $0x91] sm:$0xff]
        %v337 = vld [vmem:[%s291 + $0x99] sm:$0xff]
        %v338 = vld [vmem:[%s291 + $0xa9] sm:$0xff]
        %v339 = vld [vmem:[%s291 + $0xb1] sm:$0xff]
        %v340 = vld [vmem:[%s291 + $0xc1] sm:$0xff]
        %v341 = vld [vmem:[%s291 + $0xc9] sm:$0xff]
        %v342 = vld [vmem:[%s291 + $0xd9] sm:$0xff]
        %v343 = vld [vmem:[%s291 + $0xe1] sm:$0xff]
        %v344 = vld [vmem:[%s291 + $0xf1] sm:$0xff]
        %v345 = vld [vmem:[%s291 + $0xf9] sm:$0xff]
        %v346 = vld [vmem:[%s291 + $0x109] sm:$0xff]
        %v347 = vld [vmem:[%s291 + $0x111] sm:$0xff]
        %v348 = vld [vmem:[%s291 + $0x121] sm:$0xff]
        %v349 = vld [vmem:[%s291 + $0x129] sm:$0xff]
        %v350 = vld [vmem:[%s291 + $0x139] sm:$0xff]
        %v351 = vld [vmem:[%s291 + $0x141] sm:$0xff]
        %v352 = vld [vmem:[%s291 + $0x151] sm:$0xff]
        %v353 = vld [vmem:[%s291 + $0x159] sm:$0xff]
        %v354 = vld [vmem:[%s291 + $0x169] sm:$0xff]
        %v355 = vld [vmem:[%s291 + $0x171] sm:$0xff]
        %v356 = vld [vmem:[%s291 + $0x2] sm:$0xff]
        %v357 = vld [vmem:[%s291 + $0xa] sm:$0xff]
        %v358 = vld [vmem:[%s291 + $0x1a] sm:$0xff]
        %v359 = vld [vmem:[%s291 + $0x22] sm:$0xff]
        %v360 = vld [vmem:[%s291 + $0x32] sm:$0xff]
        %v361 = vld [vmem:[%s291 + $0x3a] sm:$0xff]
        %v362 = vld [vmem:[%s291 + $0x4a] sm:$0xff]
        %v363 = vld [vmem:[%s291 + $0x52] sm:$0xff]
        %v364 = vld [vmem:[%s291 + $0x62] sm:$0xff]
        %v365 = vld [vmem:[%s291 + $0x6a] sm:$0xff]
        %v366 = vld [vmem:[%s291 + $0x7a] sm:$0xff]
        %v367 = vld [vmem:[%s291 + $0x82] sm:$0xff]
        %v368 = vld [vmem:[%s291 + $0x92] sm:$0xff]
        %v369 = vld [vmem:[%s291 + $0x9a] sm:$0xff]
        %v370 = vld [vmem:[%s291 + $0xaa] sm:$0xff]
        %v371 = vld [vmem:[%s291 + $0xb2] sm:$0xff]
        %v372 = vld [vmem:[%s291 + $0xc2] sm:$0xff]
        %v373 = vld [vmem:[%s291 + $0xca] sm:$0xff]
        %v374 = vld [vmem:[%s291 + $0xda] sm:$0xff]
        %v375 = vld [vmem:[%s291 + $0xe2] sm:$0xff]
        %v376 = vld [vmem:[%s291 + $0xf2] sm:$0xff]
        %v377 = vld [vmem:[%s291 + $0xfa] sm:$0xff]
        %v378 = vld [vmem:[%s291 + $0x10a] sm:$0xff]
        %v379 = vld [vmem:[%s291 + $0x112] sm:$0xff]
        %v380 = vld [vmem:[%s291 + $0x122] sm:$0xff]
        %v381 = vld [vmem:[%s291 + $0x12a] sm:$0xff]
        %v382 = vld [vmem:[%s291 + $0x13a] sm:$0xff]
        %v383 = vld [vmem:[%s291 + $0x142] sm:$0xff]
        %v384 = vld [vmem:[%s291 + $0x152] sm:$0xff]
        %v385 = vld [vmem:[%s291 + $0x15a] sm:$0xff]
        %v386 = vld [vmem:[%s291 + $0x16a] sm:$0xff]
        %v387 = vld [vmem:[%s291 + $0x172] sm:$0xff]
        %s388 = scalar_lea.vmem %s194, 48
        %v389 = vld [vmem:[%s388] sm:$0xff]
        %v390 = vld [vmem:[%s388 + $0x8] sm:$0xff]
        %v391 = vld [vmem:[%s388 + $0x18] sm:$0xff]
        %v392 = vld [vmem:[%s388 + $0x20] sm:$0xff]
        %v393 = vld [vmem:[%s388 + $0x30] sm:$0xff]
        %v394 = vld [vmem:[%s388 + $0x38] sm:$0xff]
        %v395 = vld [vmem:[%s388 + $0x48] sm:$0xff]
        %v396 = vld [vmem:[%s388 + $0x50] sm:$0xff]
        %v397 = vld [vmem:[%s388 + $0x60] sm:$0xff]
        %v398 = vld [vmem:[%s388 + $0x68] sm:$0xff]
        %v399 = vld [vmem:[%s388 + $0x78] sm:$0xff]
        %v400 = vld [vmem:[%s388 + $0x80] sm:$0xff]
        %v401 = vld [vmem:[%s388 + $0x90] sm:$0xff]
        %v402 = vld [vmem:[%s388 + $0x98] sm:$0xff]
        %v403 = vld [vmem:[%s388 + $0xa8] sm:$0xff]
        %v404 = vld [vmem:[%s388 + $0xb0] sm:$0xff]
        %v405 = vld [vmem:[%s388 + $0xc0] sm:$0xff]
        %v406 = vld [vmem:[%s388 + $0xc8] sm:$0xff]
        %v407 = vld [vmem:[%s388 + $0xd8] sm:$0xff]
        %v408 = vld [vmem:[%s388 + $0xe0] sm:$0xff]
        %v409 = vld [vmem:[%s388 + $0xf0] sm:$0xff]
        %v410 = vld [vmem:[%s388 + $0xf8] sm:$0xff]
        %v411 = vld [vmem:[%s388 + $0x108] sm:$0xff]
        %v412 = vld [vmem:[%s388 + $0x110] sm:$0xff]
        %v413 = vld [vmem:[%s388 + $0x120] sm:$0xff]
        %v414 = vld [vmem:[%s388 + $0x128] sm:$0xff]
        %v415 = vld [vmem:[%s388 + $0x138] sm:$0xff]
        %v416 = vld [vmem:[%s388 + $0x140] sm:$0xff]
        %v417 = vld [vmem:[%s388 + $0x150] sm:$0xff]
        %v418 = vld [vmem:[%s388 + $0x158] sm:$0xff]
        %v419 = vld [vmem:[%s388 + $0x168] sm:$0xff]
        %v420 = vld [vmem:[%s388 + $0x170] sm:$0xff]
        %v421 = vld [vmem:[%s388 + $0x1] sm:$0xff]
        %v422 = vld [vmem:[%s388 + $0x9] sm:$0xff]
        %v423 = vld [vmem:[%s388 + $0x19] sm:$0xff]
        %v424 = vld [vmem:[%s388 + $0x21] sm:$0xff]
        %v425 = vld [vmem:[%s388 + $0x31] sm:$0xff]
        %v426 = vld [vmem:[%s388 + $0x39] sm:$0xff]
        %v427 = vld [vmem:[%s388 + $0x49] sm:$0xff]
        %v428 = vld [vmem:[%s388 + $0x51] sm:$0xff]
        %v429 = vld [vmem:[%s388 + $0x61] sm:$0xff]
        %v430 = vld [vmem:[%s388 + $0x69] sm:$0xff]
        %v431 = vld [vmem:[%s388 + $0x79] sm:$0xff]
        %v432 = vld [vmem:[%s388 + $0x81] sm:$0xff]
        %v433 = vld [vmem:[%s388 + $0x91] sm:$0xff]
        %v434 = vld [vmem:[%s388 + $0x99] sm:$0xff]
        %v435 = vld [vmem:[%s388 + $0xa9] sm:$0xff]
        %v436 = vld [vmem:[%s388 + $0xb1] sm:$0xff]
        %v437 = vld [vmem:[%s388 + $0xc1] sm:$0xff]
        %v438 = vld [vmem:[%s388 + $0xc9] sm:$0xff]
        %v439 = vld [vmem:[%s388 + $0xd9] sm:$0xff]
        %v440 = vld [vmem:[%s388 + $0xe1] sm:$0xff]
        %v441 = vld [vmem:[%s388 + $0xf1] sm:$0xff]
        %v442 = vld [vmem:[%s388 + $0xf9] sm:$0xff]
        %v443 = vld [vmem:[%s388 + $0x109] sm:$0xff]
        %v444 = vld [vmem:[%s388 + $0x111] sm:$0xff]
        %v445 = vld [vmem:[%s388 + $0x121] sm:$0xff]
        %v446 = vld [vmem:[%s388 + $0x129] sm:$0xff]
        %v447 = vld [vmem:[%s388 + $0x139] sm:$0xff]
        %v448 = vld [vmem:[%s388 + $0x141] sm:$0xff]
        %v449 = vld [vmem:[%s388 + $0x151] sm:$0xff]
        %v450 = vld [vmem:[%s388 + $0x159] sm:$0xff]
        %v451 = vld [vmem:[%s388 + $0x169] sm:$0xff]
        %v452 = vld [vmem:[%s388 + $0x171] sm:$0xff]
        %v453 = vld [vmem:[%s388 + $0x2] sm:$0xff]
        %v454 = vld [vmem:[%s388 + $0xa] sm:$0xff]
        %v455 = vld [vmem:[%s388 + $0x1a] sm:$0xff]
        %v456 = vld [vmem:[%s388 + $0x22] sm:$0xff]
        %v457 = vld [vmem:[%s388 + $0x32] sm:$0xff]
        %v458 = vld [vmem:[%s388 + $0x3a] sm:$0xff]
        %v459 = vld [vmem:[%s388 + $0x4a] sm:$0xff]
        %v460 = vld [vmem:[%s388 + $0x52] sm:$0xff]
        %v461 = vld [vmem:[%s388 + $0x62] sm:$0xff]
        %v462 = vld [vmem:[%s388 + $0x6a] sm:$0xff]
        %v463 = vld [vmem:[%s388 + $0x7a] sm:$0xff]
        %v464 = vld [vmem:[%s388 + $0x82] sm:$0xff]
        %v465 = vld [vmem:[%s388 + $0x92] sm:$0xff]
        %v466 = vld [vmem:[%s388 + $0x9a] sm:$0xff]
        %v467 = vld [vmem:[%s388 + $0xaa] sm:$0xff]
        %v468 = vld [vmem:[%s388 + $0xb2] sm:$0xff]
        %v469 = vld [vmem:[%s388 + $0xc2] sm:$0xff]
        %v470 = vld [vmem:[%s388 + $0xca] sm:$0xff]
        %v471 = vld [vmem:[%s388 + $0xda] sm:$0xff]
        %v472 = vld [vmem:[%s388 + $0xe2] sm:$0xff]
        %v473 = vld [vmem:[%s388 + $0xf2] sm:$0xff]
        %v474 = vld [vmem:[%s388 + $0xfa] sm:$0xff]
        %v475 = vld [vmem:[%s388 + $0x10a] sm:$0xff]
        %v476 = vld [vmem:[%s388 + $0x112] sm:$0xff]
        %v477 = vld [vmem:[%s388 + $0x122] sm:$0xff]
        %v478 = vld [vmem:[%s388 + $0x12a] sm:$0xff]
        %v479 = vld [vmem:[%s388 + $0x13a] sm:$0xff]
        %v480 = vld [vmem:[%s388 + $0x142] sm:$0xff]
        %v481 = vld [vmem:[%s388 + $0x152] sm:$0xff]
        %v482 = vld [vmem:[%s388 + $0x15a] sm:$0xff]
        %v483 = vld [vmem:[%s388 + $0x16a] sm:$0xff]
        %v484 = vld [vmem:[%s388 + $0x172] sm:$0xff]
        %v485 = vld [vmem:[#allocation2] sm:$0xff]
        %v486 = vld [vmem:[#allocation2 + $0x8] sm:$0xff]
        %v487 = vld [vmem:[#allocation2 + $0x10] sm:$0xff]
        %v488 = vld [vmem:[#allocation2 + $0x18] sm:$0xff]
        %v489 = vld [vmem:[#allocation2 + $0x20] sm:$0xff]
        %v490 = vld [vmem:[#allocation2 + $0x28] sm:$0xff]
        %v491 = vld [vmem:[#allocation2 + $0x30] sm:$0xff]
        %v492 = vld [vmem:[#allocation2 + $0x38] sm:$0xff]
        %v493 = vld [vmem:[#allocation2 + $0x40] sm:$0xff]
        %v494 = vld [vmem:[#allocation2 + $0x48] sm:$0xff]
        %v495 = vld [vmem:[#allocation2 + $0x50] sm:$0xff]
        %v496 = vld [vmem:[#allocation2 + $0x58] sm:$0xff]
        %v497 = vld [vmem:[#allocation2 + $0x60] sm:$0xff]
        %v498 = vld [vmem:[#allocation2 + $0x68] sm:$0xff]
        %v499 = vld [vmem:[#allocation2 + $0x70] sm:$0xff]
        %v500 = vld [vmem:[#allocation2 + $0x78] sm:$0xff]
        %v501 = vld [vmem:[#allocation2 + $0x80] sm:$0xff]
        %v502 = vld [vmem:[#allocation2 + $0x88] sm:$0xff]
        %v503 = vld [vmem:[#allocation2 + $0x90] sm:$0xff]
        %v504 = vld [vmem:[#allocation2 + $0x98] sm:$0xff]
        %v505 = vld [vmem:[#allocation2 + $0xa0] sm:$0xff]
        %v506 = vld [vmem:[#allocation2 + $0xa8] sm:$0xff]
        %v507 = vld [vmem:[#allocation2 + $0xb0] sm:$0xff]
        %v508 = vld [vmem:[#allocation2 + $0xb8] sm:$0xff]
        %v509 = vld [vmem:[#allocation2 + $0xc0] sm:$0xff]
        %v510 = vld [vmem:[#allocation2 + $0xc8] sm:$0xff]
        %v511 = vld [vmem:[#allocation2 + $0xd0] sm:$0xff]
        %v512 = vld [vmem:[#allocation2 + $0xd8] sm:$0xff]
        %v513 = vld [vmem:[#allocation2 + $0xe0] sm:$0xff]
        %v514 = vld [vmem:[#allocation2 + $0xe8] sm:$0xff]
        %v515 = vld [vmem:[#allocation2 + $0xf0] sm:$0xff]
        %v516 = vld [vmem:[#allocation2 + $0xf8] sm:$0xff]
        %v517 = vld [vmem:[#allocation2 + $0x100] sm:$0xff]
        %v518 = vld [vmem:[#allocation2 + $0x108] sm:$0xff]
        %v519 = vld [vmem:[#allocation2 + $0x110] sm:$0xff]
        %v520 = vld [vmem:[#allocation2 + $0x118] sm:$0xff]
        %v521 = vld [vmem:[#allocation2 + $0x120] sm:$0xff]
        %v522 = vld [vmem:[#allocation2 + $0x128] sm:$0xff]
        %v523 = vld [vmem:[#allocation2 + $0x130] sm:$0xff]
        %v524 = vld [vmem:[#allocation2 + $0x138] sm:$0xff]
        %v525 = vld [vmem:[#allocation2 + $0x140] sm:$0xff]
        %v526 = vld [vmem:[#allocation2 + $0x148] sm:$0xff]
        %v527 = vld [vmem:[#allocation2 + $0x150] sm:$0xff]
        %v528 = vld [vmem:[#allocation2 + $0x158] sm:$0xff]
        %v529 = vld [vmem:[#allocation2 + $0x160] sm:$0xff]
        %v530 = vld [vmem:[#allocation2 + $0x168] sm:$0xff]
        %v531 = vld [vmem:[#allocation2 + $0x170] sm:$0xff]
        %v532 = vld [vmem:[#allocation2 + $0x178] sm:$0xff]
        %v533 = vld [vmem:[#allocation2 + $0x180] sm:$0xff]
        %v534 = vld [vmem:[#allocation2 + $0x188] sm:$0xff]
        %v535 = vld [vmem:[#allocation2 + $0x190] sm:$0xff]
        %v536 = vld [vmem:[#allocation2 + $0x198] sm:$0xff]
        %v537 = vld [vmem:[#allocation2 + $0x1a0] sm:$0xff]
        %v538 = vld [vmem:[#allocation2 + $0x1a8] sm:$0xff]
        %v539 = vld [vmem:[#allocation2 + $0x1b0] sm:$0xff]
        %v540 = vld [vmem:[#allocation2 + $0x1b8] sm:$0xff]
        %v541 = vld [vmem:[#allocation2 + $0x1c0] sm:$0xff]
        %v542 = vld [vmem:[#allocation2 + $0x1c8] sm:$0xff]
        %v543 = vld [vmem:[#allocation2 + $0x1d0] sm:$0xff]
        %v544 = vld [vmem:[#allocation2 + $0x1d8] sm:$0xff]
        %v545 = vld [vmem:[#allocation2 + $0x1e0] sm:$0xff]
        %v546 = vld [vmem:[#allocation2 + $0x1e8] sm:$0xff]
        %v547 = vld [vmem:[#allocation2 + $0x1f0] sm:$0xff]
        %v548 = vld [vmem:[#allocation2 + $0x1f8] sm:$0xff]
        %v549 = vld [vmem:[#allocation2 + $0x200] sm:$0xff]
        %v550 = vld [vmem:[#allocation2 + $0x208] sm:$0xff]
        %v551 = vld [vmem:[#allocation2 + $0x210] sm:$0xff]
        %v552 = vld [vmem:[#allocation2 + $0x218] sm:$0xff]
        %v553 = vld [vmem:[#allocation2 + $0x220] sm:$0xff]
        %v554 = vld [vmem:[#allocation2 + $0x228] sm:$0xff]
        %v555 = vld [vmem:[#allocation2 + $0x230] sm:$0xff]
        %v556 = vld [vmem:[#allocation2 + $0x238] sm:$0xff]
        %v557 = vld [vmem:[#allocation2 + $0x240] sm:$0xff]
        %v558 = vld [vmem:[#allocation2 + $0x248] sm:$0xff]
        %v559 = vld [vmem:[#allocation2 + $0x250] sm:$0xff]
        %v560 = vld [vmem:[#allocation2 + $0x258] sm:$0xff]
        %v561 = vld [vmem:[#allocation2 + $0x260] sm:$0xff]
        %v562 = vld [vmem:[#allocation2 + $0x268] sm:$0xff]
        %v563 = vld [vmem:[#allocation2 + $0x270] sm:$0xff]
        %v564 = vld [vmem:[#allocation2 + $0x278] sm:$0xff]
        %v565 = vld [vmem:[#allocation2 + $0x280] sm:$0xff]
        %v566 = vld [vmem:[#allocation2 + $0x288] sm:$0xff]
        %v567 = vld [vmem:[#allocation2 + $0x290] sm:$0xff]
        %v568 = vld [vmem:[#allocation2 + $0x298] sm:$0xff]
        %v569 = vld [vmem:[#allocation2 + $0x2a0] sm:$0xff]
        %v570 = vld [vmem:[#allocation2 + $0x2a8] sm:$0xff]
        %v571 = vld [vmem:[#allocation2 + $0x2b0] sm:$0xff]
        %v572 = vld [vmem:[#allocation2 + $0x2b8] sm:$0xff]
        %v573 = vld [vmem:[#allocation2 + $0x2c0] sm:$0xff]
        %v574 = vld [vmem:[#allocation2 + $0x2c8] sm:$0xff]
        %v575 = vld [vmem:[#allocation2 + $0x2d0] sm:$0xff]
        %v576 = vld [vmem:[#allocation2 + $0x2d8] sm:$0xff]
        %v577 = vld [vmem:[#allocation2 + $0x2e0] sm:$0xff]
        %v578 = vld [vmem:[#allocation2 + $0x2e8] sm:$0xff]
        %v579 = vld [vmem:[#allocation2 + $0x2f0] sm:$0xff]
        %v580 = vld [vmem:[#allocation2 + $0x2f8] sm:$0xff]
        %v581 = vld [vmem:[#allocation2 + $0x300] sm:$0xff]
        %v582 = vld [vmem:[#allocation2 + $0x308] sm:$0xff]
        %v583 = vld [vmem:[#allocation2 + $0x310] sm:$0xff]
        %v584 = vld [vmem:[#allocation2 + $0x318] sm:$0xff]
        %v585 = vld [vmem:[#allocation2 + $0x320] sm:$0xff]
        %v586 = vld [vmem:[#allocation2 + $0x328] sm:$0xff]
        %v587 = vld [vmem:[#allocation2 + $0x330] sm:$0xff]
        %v588 = vld [vmem:[#allocation2 + $0x338] sm:$0xff]
        %v589 = vld [vmem:[#allocation2 + $0x340] sm:$0xff]
        %v590 = vld [vmem:[#allocation2 + $0x348] sm:$0xff]
        %v591 = vld [vmem:[#allocation2 + $0x350] sm:$0xff]
        %v592 = vld [vmem:[#allocation2 + $0x358] sm:$0xff]
        %v593 = vld [vmem:[#allocation2 + $0x360] sm:$0xff]
        %v594 = vld [vmem:[#allocation2 + $0x368] sm:$0xff]
        %v595 = vld [vmem:[#allocation2 + $0x370] sm:$0xff]
        %v596 = vld [vmem:[#allocation2 + $0x378] sm:$0xff]
        %v597 = vld [vmem:[#allocation2 + $0x380] sm:$0xff]
        %v598 = vld [vmem:[#allocation2 + $0x388] sm:$0xff]
        %v599 = vld [vmem:[#allocation2 + $0x390] sm:$0xff]
        %v600 = vld [vmem:[#allocation2 + $0x398] sm:$0xff]
        %v601 = vld [vmem:[#allocation2 + $0x3a0] sm:$0xff]
        %v602 = vld [vmem:[#allocation2 + $0x3a8] sm:$0xff]
        %v603 = vld [vmem:[#allocation2 + $0x3b0] sm:$0xff]
        %v604 = vld [vmem:[#allocation2 + $0x3b8] sm:$0xff]
        %v605 = vld [vmem:[#allocation2 + $0x3c0] sm:$0xff]
        %v606 = vld [vmem:[#allocation2 + $0x3c8] sm:$0xff]
        %v607 = vld [vmem:[#allocation2 + $0x3d0] sm:$0xff]
        %v608 = vld [vmem:[#allocation2 + $0x3d8] sm:$0xff]
        %v609 = vld [vmem:[#allocation2 + $0x3e0] sm:$0xff]
        %v610 = vld [vmem:[#allocation2 + $0x3e8] sm:$0xff]
        %v611 = vld [vmem:[#allocation2 + $0x3f0] sm:$0xff]
        %v612 = vld [vmem:[#allocation2 + $0x3f8] sm:$0xff]
        %v613 = vld [vmem:[#allocation2 + $0x400] sm:$0xff]
        %v614 = vld [vmem:[#allocation2 + $0x408] sm:$0xff]
        %v615 = vld [vmem:[#allocation2 + $0x410] sm:$0xff]
        %v616 = vld [vmem:[#allocation2 + $0x418] sm:$0xff]
        %v617 = vld [vmem:[#allocation2 + $0x420] sm:$0xff]
        %v618 = vld [vmem:[#allocation2 + $0x428] sm:$0xff]
        %v619 = vld [vmem:[#allocation2 + $0x430] sm:$0xff]
        %v620 = vld [vmem:[#allocation2 + $0x438] sm:$0xff]
        %v621 = vld [vmem:[#allocation2 + $0x440] sm:$0xff]
        %v622 = vld [vmem:[#allocation2 + $0x448] sm:$0xff]
        %v623 = vld [vmem:[#allocation2 + $0x450] sm:$0xff]
        %v624 = vld [vmem:[#allocation2 + $0x458] sm:$0xff]
        %v625 = vld [vmem:[#allocation2 + $0x460] sm:$0xff]
        %v626 = vld [vmem:[#allocation2 + $0x468] sm:$0xff]
        %v627 = vld [vmem:[#allocation2 + $0x470] sm:$0xff]
        %v628 = vld [vmem:[#allocation2 + $0x478] sm:$0xff]
        %v629 = vld [vmem:[#allocation2 + $0x480] sm:$0xff]
        %v630 = vld [vmem:[#allocation2 + $0x488] sm:$0xff]
        %v631 = vld [vmem:[#allocation2 + $0x490] sm:$0xff]
        %v632 = vld [vmem:[#allocation2 + $0x498] sm:$0xff]
        %v633 = vld [vmem:[#allocation2 + $0x4a0] sm:$0xff]
        %v634 = vld [vmem:[#allocation2 + $0x4a8] sm:$0xff]
        %v635 = vld [vmem:[#allocation2 + $0x4b0] sm:$0xff]
        %v636 = vld [vmem:[#allocation2 + $0x4b8] sm:$0xff]
        %v637 = vld [vmem:[#allocation2 + $0x4c0] sm:$0xff]
        %v638 = vld [vmem:[#allocation2 + $0x4c8] sm:$0xff]
        %v639 = vld [vmem:[#allocation2 + $0x4d0] sm:$0xff]
        %v640 = vld [vmem:[#allocation2 + $0x4d8] sm:$0xff]
        %v641 = vld [vmem:[#allocation2 + $0x4e0] sm:$0xff]
        %v642 = vld [vmem:[#allocation2 + $0x4e8] sm:$0xff]
        %v643 = vld [vmem:[#allocation2 + $0x4f0] sm:$0xff]
        %v644 = vld [vmem:[#allocation2 + $0x4f8] sm:$0xff]
        %v645 = vld [vmem:[#allocation2 + $0x500] sm:$0xff]
        %v646 = vld [vmem:[#allocation2 + $0x508] sm:$0xff]
        %v647 = vld [vmem:[#allocation2 + $0x510] sm:$0xff]
        %v648 = vld [vmem:[#allocation2 + $0x518] sm:$0xff]
        %v649 = vld [vmem:[#allocation2 + $0x520] sm:$0xff]
        %v650 = vld [vmem:[#allocation2 + $0x528] sm:$0xff]
        %v651 = vld [vmem:[#allocation2 + $0x530] sm:$0xff]
        %v652 = vld [vmem:[#allocation2 + $0x538] sm:$0xff]
        %v653 = vld [vmem:[#allocation2 + $0x540] sm:$0xff]
        %v654 = vld [vmem:[#allocation2 + $0x548] sm:$0xff]
        %v655 = vld [vmem:[#allocation2 + $0x550] sm:$0xff]
        %v656 = vld [vmem:[#allocation2 + $0x558] sm:$0xff]
        %v657 = vld [vmem:[#allocation2 + $0x560] sm:$0xff]
        %v658 = vld [vmem:[#allocation2 + $0x568] sm:$0xff]
        %v659 = vld [vmem:[#allocation2 + $0x570] sm:$0xff]
        %v660 = vld [vmem:[#allocation2 + $0x578] sm:$0xff]
        %v661 = vld [vmem:[#allocation2 + $0x580] sm:$0xff]
        %v662 = vld [vmem:[#allocation2 + $0x588] sm:$0xff]
        %v663 = vld [vmem:[#allocation2 + $0x590] sm:$0xff]
        %v664 = vld [vmem:[#allocation2 + $0x598] sm:$0xff]
        %v665 = vld [vmem:[#allocation2 + $0x5a0] sm:$0xff]
        %v666 = vld [vmem:[#allocation2 + $0x5a8] sm:$0xff]
        %v667 = vld [vmem:[#allocation2 + $0x5b0] sm:$0xff]
        %v668 = vld [vmem:[#allocation2 + $0x5b8] sm:$0xff]
        %v669 = vld [vmem:[#allocation2 + $0x5c0] sm:$0xff]
        %v670 = vld [vmem:[#allocation2 + $0x5c8] sm:$0xff]
        %v671 = vld [vmem:[#allocation2 + $0x5d0] sm:$0xff]
        %v672 = vld [vmem:[#allocation2 + $0x5d8] sm:$0xff]
        %v673 = vld [vmem:[#allocation2 + $0x5e0] sm:$0xff]
        %v674 = vld [vmem:[#allocation2 + $0x5e8] sm:$0xff]
        %v675 = vld [vmem:[#allocation2 + $0x5f0] sm:$0xff]
        %v676 = vld [vmem:[#allocation2 + $0x5f8] sm:$0xff]
        %v677 = vld [vmem:[#allocation2 + $0x600] sm:$0xff]
        %v678 = vld [vmem:[#allocation2 + $0x608] sm:$0xff]
        %v679 = vld [vmem:[#allocation2 + $0x610] sm:$0xff]
        %v680 = vld [vmem:[#allocation2 + $0x618] sm:$0xff]
        %v681 = vld [vmem:[#allocation2 + $0x620] sm:$0xff]
        %v682 = vld [vmem:[#allocation2 + $0x628] sm:$0xff]
        %v683 = vld [vmem:[#allocation2 + $0x630] sm:$0xff]
        %v684 = vld [vmem:[#allocation2 + $0x638] sm:$0xff]
        %v685 = vld [vmem:[#allocation2 + $0x640] sm:$0xff]
        %v686 = vld [vmem:[#allocation2 + $0x648] sm:$0xff]
        %v687 = vld [vmem:[#allocation2 + $0x650] sm:$0xff]
        %v688 = vld [vmem:[#allocation2 + $0x658] sm:$0xff]
        %v689 = vld [vmem:[#allocation2 + $0x660] sm:$0xff]
        %v690 = vld [vmem:[#allocation2 + $0x668] sm:$0xff]
        %v691 = vld [vmem:[#allocation2 + $0x670] sm:$0xff]
        %v692 = vld [vmem:[#allocation2 + $0x678] sm:$0xff]
        %v693 = vld [vmem:[#allocation2 + $0x680] sm:$0xff]
        %v694 = vld [vmem:[#allocation2 + $0x688] sm:$0xff]
        %v695 = vld [vmem:[#allocation2 + $0x690] sm:$0xff]
        %v696 = vld [vmem:[#allocation2 + $0x698] sm:$0xff]
        %v697 = vld [vmem:[#allocation2 + $0x6a0] sm:$0xff]
        %v698 = vld [vmem:[#allocation2 + $0x6a8] sm:$0xff]
        %v699 = vld [vmem:[#allocation2 + $0x6b0] sm:$0xff]
        %v700 = vld [vmem:[#allocation2 + $0x6b8] sm:$0xff]
        %v701 = vld [vmem:[#allocation2 + $0x6c0] sm:$0xff]
        %v702 = vld [vmem:[#allocation2 + $0x6c8] sm:$0xff]
        %v703 = vld [vmem:[#allocation2 + $0x6d0] sm:$0xff]
        %v704 = vld [vmem:[#allocation2 + $0x6d8] sm:$0xff]
        %v705 = vld [vmem:[#allocation2 + $0x6e0] sm:$0xff]
        %v706 = vld [vmem:[#allocation2 + $0x6e8] sm:$0xff]
        %v707 = vld [vmem:[#allocation2 + $0x6f0] sm:$0xff]
        %v708 = vld [vmem:[#allocation2 + $0x6f8] sm:$0xff]
        %v709 = vld [vmem:[#allocation2 + $0x700] sm:$0xff]
        %v710 = vld [vmem:[#allocation2 + $0x708] sm:$0xff]
        %v711 = vld [vmem:[#allocation2 + $0x710] sm:$0xff]
        %v712 = vld [vmem:[#allocation2 + $0x718] sm:$0xff]
        %v713 = vld [vmem:[#allocation2 + $0x720] sm:$0xff]
        %v714 = vld [vmem:[#allocation2 + $0x728] sm:$0xff]
        %v715 = vld [vmem:[#allocation2 + $0x730] sm:$0xff]
        %v716 = vld [vmem:[#allocation2 + $0x738] sm:$0xff]
        %v717 = vld [vmem:[#allocation2 + $0x740] sm:$0xff]
        %v718 = vld [vmem:[#allocation2 + $0x748] sm:$0xff]
        %v719 = vld [vmem:[#allocation2 + $0x750] sm:$0xff]
        %v720 = vld [vmem:[#allocation2 + $0x758] sm:$0xff]
        %v721 = vld [vmem:[#allocation2 + $0x760] sm:$0xff]
        %v722 = vld [vmem:[#allocation2 + $0x768] sm:$0xff]
        %v723 = vld [vmem:[#allocation2 + $0x770] sm:$0xff]
        %v724 = vld [vmem:[#allocation2 + $0x778] sm:$0xff]
        %v725 = vld [vmem:[#allocation2 + $0x780] sm:$0xff]
        %v726 = vld [vmem:[#allocation2 + $0x788] sm:$0xff]
        %v727 = vld [vmem:[#allocation2 + $0x790] sm:$0xff]
        %v728 = vld [vmem:[#allocation2 + $0x798] sm:$0xff]
        %v729 = vld [vmem:[#allocation2 + $0x7a0] sm:$0xff]
        %v730 = vld [vmem:[#allocation2 + $0x7a8] sm:$0xff]
        %v731 = vld [vmem:[#allocation2 + $0x7b0] sm:$0xff]
        %v732 = vld [vmem:[#allocation2 + $0x7b8] sm:$0xff]
        %v733 = vld [vmem:[#allocation2 + $0x7c0] sm:$0xff]
        %v734 = vld [vmem:[#allocation2 + $0x7c8] sm:$0xff]
        %v735 = vld [vmem:[#allocation2 + $0x7d0] sm:$0xff]
        %v736 = vld [vmem:[#allocation2 + $0x7d8] sm:$0xff]
        %v737 = vld [vmem:[#allocation2 + $0x7e0] sm:$0xff]
        %v738 = vld [vmem:[#allocation2 + $0x7e8] sm:$0xff]
        %v739 = vld [vmem:[#allocation2 + $0x7f0] sm:$0xff]
        %v740 = vld [vmem:[#allocation2 + $0x7f8] sm:$0xff]
        %v741 = vld [vmem:[#allocation2 + $0x800] sm:$0xff]
        %v742 = vld [vmem:[#allocation2 + $0x808] sm:$0xff]
        %v743 = vld [vmem:[#allocation2 + $0x810] sm:$0xff]
        %v744 = vld [vmem:[#allocation2 + $0x818] sm:$0xff]
        %v745 = vld [vmem:[#allocation2 + $0x820] sm:$0xff]
        %v746 = vld [vmem:[#allocation2 + $0x828] sm:$0xff]
        %v747 = vld [vmem:[#allocation2 + $0x830] sm:$0xff]
        %v748 = vld [vmem:[#allocation2 + $0x838] sm:$0xff]
        %v749 = vld [vmem:[#allocation2 + $0x840] sm:$0xff]
        %v750 = vld [vmem:[#allocation2 + $0x848] sm:$0xff]
        %v751 = vld [vmem:[#allocation2 + $0x850] sm:$0xff]
        %v752 = vld [vmem:[#allocation2 + $0x858] sm:$0xff]
        %v753 = vld [vmem:[#allocation2 + $0x860] sm:$0xff]
        %v754 = vld [vmem:[#allocation2 + $0x868] sm:$0xff]
        %v755 = vld [vmem:[#allocation2 + $0x870] sm:$0xff]
        %v756 = vld [vmem:[#allocation2 + $0x878] sm:$0xff]
        %v757 = vld [vmem:[#allocation2 + $0x880] sm:$0xff]
        %v758 = vld [vmem:[#allocation2 + $0x888] sm:$0xff]
        %v759 = vld [vmem:[#allocation2 + $0x890] sm:$0xff]
        %v760 = vld [vmem:[#allocation2 + $0x898] sm:$0xff]
        %v761 = vld [vmem:[#allocation2 + $0x8a0] sm:$0xff]
        %v762 = vld [vmem:[#allocation2 + $0x8a8] sm:$0xff]
        %v763 = vld [vmem:[#allocation2 + $0x8b0] sm:$0xff]
        %v764 = vld [vmem:[#allocation2 + $0x8b8] sm:$0xff]
        %v765 = vld [vmem:[#allocation2 + $0x8c0] sm:$0xff]
        %v766 = vld [vmem:[#allocation2 + $0x8c8] sm:$0xff]
        %v767 = vld [vmem:[#allocation2 + $0x8d0] sm:$0xff]
        %v768 = vld [vmem:[#allocation2 + $0x8d8] sm:$0xff]
        %v769 = vld [vmem:[#allocation2 + $0x8e0] sm:$0xff]
        %v770 = vld [vmem:[#allocation2 + $0x8e8] sm:$0xff]
        %v771 = vld [vmem:[#allocation2 + $0x8f0] sm:$0xff]
        %v772 = vld [vmem:[#allocation2 + $0x8f8] sm:$0xff]
        %773 = vmatprep.subr.mxu0 %v486
        %774 = vmatpush1.msra.mxu0 %v485
        %775 = vmatprep.subr.mxu0 %v488
        %776 = vmatpush1.msra.mxu0 %v487
        %777 = vmatprep.subr.mxu0 %v490
        %778 = vmatpush1.msra.mxu0 %v489
        %779 = vmatprep.subr.mxu0 %v492
        %780 = vmatpush1.msra.mxu0 %v491
        %781 = vmatprep.subr.mxu0 %v494
        %782 = vmatpush1.msra.mxu0 %v493
        %783 = vmatprep.subr.mxu0 %v496
        %784 = vmatpush1.msra.mxu0 %v495
        %785 = vmatprep.subr.mxu0 %v498
        %786 = vmatpush1.msra.mxu0 %v497
        %787 = vmatprep.subr.mxu0 %v500
        %788 = vmatpush1.msra.mxu0 %v499
        %789 = vmatprep.subr.mxu0 %v502
        %790 = vmatpush1.msra.mxu0 %v501
        %791 = vmatprep.subr.mxu0 %v504
        %792 = vmatpush1.msra.mxu0 %v503
        %793 = vmatprep.subr.mxu0 %v506
        %794 = vmatpush1.msra.mxu0 %v505
        %795 = vmatprep.subr.mxu0 %v508
        %796 = vmatpush1.msra.mxu0 %v507
        %797 = vmatprep.subr.mxu0 %v510
        %798 = vmatpush1.msra.mxu0 %v509
        %799 = vmatprep.subr.mxu0 %v512
        %800 = vmatpush1.msra.mxu0 %v511
        %801 = vmatprep.subr.mxu0 %v514
        %802 = vmatpush1.msra.mxu0 %v513
        %803 = vmatprep.subr.mxu0 %v516
        %804 = vmatpush1.msra.mxu0 %v515
        %805 = vmatprep.subr.mxu0 %v518
        %806 = vmatpush1.msra.mxu0 %v517
        %807 = vmatprep.subr.mxu0 %v520
        %808 = vmatpush1.msra.mxu0 %v519
        %809 = vmatprep.subr.mxu0 %v522
        %810 = vmatpush1.msra.mxu0 %v521
        %811 = vmatprep.subr.mxu0 %v524
        %812 = vmatpush1.msra.mxu0 %v523
        %813 = vmatprep.subr.mxu0 %v526
        %814 = vmatpush1.msra.mxu0 %v525
        %815 = vmatprep.subr.mxu0 %v528
        %816 = vmatpush1.msra.mxu0 %v527
        %817 = vmatprep.subr.mxu0 %v530
        %818 = vmatpush1.msra.mxu0 %v529
        %819 = vmatprep.subr.mxu0 %v532
        %820 = vmatpush1.msra.mxu0 %v531
        %821 = vmatprep.subr.mxu0 %v534
        %822 = vmatpush1.msra.mxu0 %v533
        %823 = vmatprep.subr.mxu0 %v536
        %824 = vmatpush1.msra.mxu0 %v535
        %825 = vmatprep.subr.mxu0 %v538
        %826 = vmatpush1.msra.mxu0 %v537
        %827 = vmatprep.subr.mxu0 %v540
        %828 = vmatpush1.msra.mxu0 %v539
        %829 = vmatprep.subr.mxu0 %v542
        %830 = vmatpush1.msra.mxu0 %v541
        %831 = vmatprep.subr.mxu0 %v544
        %832 = vmatpush1.msra.mxu0 %v543
        %833 = vmatprep.subr.mxu0 %v546
        %834 = vmatpush1.msra.mxu0 %v545
        %835 = vmatprep.subr.mxu0 %v548
        %836 = vmatpush1.msra.mxu0 %v547
        %837 = vmatprep.mubr.f32.mxu0 %v227
        %838 = vmatmul.mubr.f32.gmra.mrb[0].mxu0 %v195
        %v839 = vpop.f32.mrb[0].mxu0
        %v840 = vadd.f32 0.0, %v839
        %v841 = vpop.f32.mrb[0].mxu0
        %v842 = vadd.f32 0.0, %v841
        %843 = vmatprep.mubr.f32.mxu0 %v228
        %844 = vmatmul.mubr.f32.gmra.mrb[0].mxu0 %v196
        %v845 = vpop.f32.mrb[0].mxu0
        %v846 = vadd.f32 0.0, %v845
        %v847 = vpop.f32.mrb[0].mxu0
        %v848 = vadd.f32 0.0, %v847
        %849 = vmatprep.mubr.f32.mxu0 %v229
        %850 = vmatmul.mubr.f32.gmra.mrb[0].mxu0 %v197
        %v851 = vpop.f32.mrb[0].mxu0
        %v852 = vadd.f32 0.0, %v851
        %v853 = vpop.f32.mrb[0].mxu0
        %v854 = vadd.f32 0.0, %v853
        %855 = vmatprep.mubr.f32.mxu0 %v230
        %856 = vmatmul.mubr.f32.gmra.mrb[0].mxu0 %v198
        %v857 = vpop.f32.mrb[0].mxu0
        %v858 = vadd.f32 0.0, %v857
        %v859 = vpop.f32.mrb[0].mxu0
        %v860 = vadd.f32 0.0, %v859
        %861 = vmatprep.mubr.f32.mxu0 %v231
        %862 = vmatmul.mubr.f32.gmra.mrb[0].mxu0 %v199
        %v863 = vpop.f32.mrb[0].mxu0
        %v864 = vadd.f32 0.0, %v863
        %v865 = vpop.f32.mrb[0].mxu0
        %v866 = vadd.f32 0.0, %v865
        %867 = vmatprep.mubr.f32.mxu0 %v232
        %868 = vmatmul.mubr.f32.gmra.mrb[0].mxu0 %v200
        %v869 = vpop.f32.mrb[0].mxu0
        %v870 = vadd.f32 0.0, %v869
        %v871 = vpop.f32.mrb[0].mxu0
        %v872 = vadd.f32 0.0, %v871
        %873 = vmatprep.mubr.f32.mxu0 %v233
        %874 = vmatmul.mubr.f32.gmra.mrb[0].mxu0 %v201
        %v875 = vpop.f32.mrb[0].mxu0
        %v876 = vadd.f32 0.0, %v875
        %v877 = vpop.f32.mrb[0].mxu0
        %v878 = vadd.f32 0.0, %v877
        %879 = vmatprep.mubr.f32.mxu0 %v234
        %880 = vmatmul.mubr.f32.gmra.mrb[0].mxu0 %v202
        %v881 = vpop.f32.mrb[0].mxu0
        %v882 = vadd.f32 0.0, %v881
        %v883 = vpop.f32.mrb[0].mxu0
        %v884 = vadd.f32 0.0, %v883
        %885 = vmatprep.mubr.f32.mxu0 %v235
        %886 = vmatmul.mubr.f32.gmra.mrb[0].mxu0 %v203
        %v887 = vpop.f32.mrb[0].mxu0
        %v888 = vadd.f32 0.0, %v887
        %v889 = vpop.f32.mrb[0].mxu0
        %v890 = vadd.f32 0.0, %v889
        %891 = vmatprep.mubr.f32.mxu0 %v236
        %892 = vmatmul.mubr.f32.gmra.mrb[0].mxu0 %v204
        %v893 = vpop.f32.mrb[0].mxu0
        %v894 = vadd.f32 0.0, %v893
        %v895 = vpop.f32.mrb[0].mxu0
        %v896 = vadd.f32 0.0, %v895
        %897 = vmatprep.mubr.f32.mxu0 %v237
        %898 = vmatmul.mubr.f32.gmra.mrb[0].mxu0 %v205
        %v899 = vpop.f32.mrb[0].mxu0
        %v900 = vadd.f32 0.0, %v899
        %v901 = vpop.f32.mrb[0].mxu0
        %v902 = vadd.f32 0.0, %v901
        %903 = vmatprep.mubr.f32.mxu0 %v238
        %904 = vmatmul.mubr.f32.gmra.mrb[0].mxu0 %v206
        %v905 = vpop.f32.mrb[0].mxu0
        %v906 = vadd.f32 0.0, %v905
        %v907 = vpop.f32.mrb[0].mxu0
        %v908 = vadd.f32 0.0, %v907
        %909 = vmatprep.mubr.f32.mxu0 %v239
        %910 = vmatmul.mubr.f32.gmra.mrb[0].mxu0 %v207
        %v911 = vpop.f32.mrb[0].mxu0
        %v912 = vadd.f32 0.0, %v911
        %v913 = vpop.f32.mrb[0].mxu0
        %v914 = vadd.f32 0.0, %v913
        %915 = vmatprep.mubr.f32.mxu0 %v240
        %916 = vmatmul.mubr.f32.gmra.mrb[0].mxu0 %v208
        %v917 = vpop.f32.mrb[0].mxu0
        %v918 = vadd.f32 0.0, %v917
        %v919 = vpop.f32.mrb[0].mxu0
        %v920 = vadd.f32 0.0, %v919
        %921 = vmatprep.mubr.f32.mxu0 %v241
        %922 = vmatmul.mubr.f32.gmra.mrb[0].mxu0 %v209
        %v923 = vpop.f32.mrb[0].mxu0
        %v924 = vadd.f32 0.0, %v923
        %v925 = vpop.f32.mrb[0].mxu0
        %v926 = vadd.f32 0.0, %v925
        %927 = vmatprep.mubr.f32.mxu0 %v242
        %928 = vmatmul.mubr.f32.gmra.mrb[0].mxu0 %v210
        %v929 = vpop.f32.mrb[0].mxu0
        %v930 = vadd.f32 0.0, %v929
        %v931 = vpop.f32.mrb[0].mxu0
        %v932 = vadd.f32 0.0, %v931
        %933 = vmatprep.mubr.f32.mxu0 %v243
        %934 = vmatmul.mubr.f32.gmra.mrb[0].mxu0 %v211
        %v935 = vpop.f32.mrb[0].mxu0
        %v936 = vadd.f32 0.0, %v935
        %v937 = vpop.f32.mrb[0].mxu0
        %v938 = vadd.f32 0.0, %v937
        %939 = vmatprep.mubr.f32.mxu0 %v244
        %940 = vmatmul.mubr.f32.gmra.mrb[0].mxu0 %v212
        %v941 = vpop.f32.mrb[0].mxu0
        %v942 = vadd.f32 0.0, %v941
        %v943 = vpop.f32.mrb[0].mxu0
        %v944 = vadd.f32 0.0, %v943
        %945 = vmatprep.mubr.f32.mxu0 %v245
        %946 = vmatmul.mubr.f32.gmra.mrb[0].mxu0 %v213
        %v947 = vpop.f32.mrb[0].mxu0
        %v948 = vadd.f32 0.0, %v947
        %v949 = vpop.f32.mrb[0].mxu0
        %v950 = vadd.f32 0.0, %v949
        %951 = vmatprep.mubr.f32.mxu0 %v246
        %952 = vmatmul.mubr.f32.gmra.mrb[0].mxu0 %v214
        %v953 = vpop.f32.mrb[0].mxu0
        %v954 = vadd.f32 0.0, %v953
        %v955 = vpop.f32.mrb[0].mxu0
        %v956 = vadd.f32 0.0, %v955
        %957 = vmatprep.mubr.f32.mxu0 %v247
        %958 = vmatmul.mubr.f32.gmra.mrb[0].mxu0 %v215
        %v959 = vpop.f32.mrb[0].mxu0
        %v960 = vadd.f32 0.0, %v959
        %v961 = vpop.f32.mrb[0].mxu0
        %v962 = vadd.f32 0.0, %v961
        %963 = vmatprep.mubr.f32.mxu0 %v248
        %964 = vmatmul.mubr.f32.gmra.mrb[0].mxu0 %v216
        %v965 = vpop.f32.mrb[0].mxu0
        %v966 = vadd.f32 0.0, %v965
        %v967 = vpop.f32.mrb[0].mxu0
        %v968 = vadd.f32 0.0, %v967
        %969 = vmatprep.mubr.f32.mxu0 %v249
        %970 = vmatmul.mubr.f32.gmra.mrb[0].mxu0 %v217
        %v971 = vpop.f32.mrb[0].mxu0
        %v972 = vadd.f32 0.0, %v971
        %v973 = vpop.f32.mrb[0].mxu0
        %v974 = vadd.f32 0.0, %v973
        %975 = vmatprep.mubr.f32.mxu0 %v250
        %976 = vmatmul.mubr.f32.gmra.mrb[0].mxu0 %v218
        %v977 = vpop.f32.mrb[0].mxu0
        %v978 = vadd.f32 0.0, %v977
        %v979 = vpop.f32.mrb[0].mxu0
        %v980 = vadd.f32 0.0, %v979
        %981 = vmatprep.mubr.f32.mxu0 %v251
        %982 = vmatmul.mubr.f32.gmra.mrb[0].mxu0 %v219
        %v983 = vpop.f32.mrb[0].mxu0
        %v984 = vadd.f32 0.0, %v983
        %v985 = vpop.f32.mrb[0].mxu0
        %v986 = vadd.f32 0.0, %v985
        %987 = vmatprep.mubr.f32.mxu0 %v252
        %988 = vmatmul.mubr.f32.gmra.mrb[0].mxu0 %v220
        %v989 = vpop.f32.mrb[0].mxu0
        %v990 = vadd.f32 0.0, %v989
        %v991 = vpop.f32.mrb[0].mxu0
        %v992 = vadd.f32 0.0, %v991
        %993 = vmatprep.mubr.f32.mxu0 %v253
        %994 = vmatmul.mubr.f32.gmra.mrb[0].mxu0 %v221
        %v995 = vpop.f32.mrb[0].mxu0
        %v996 = vadd.f32 0.0, %v995
        %v997 = vpop.f32.mrb[0].mxu0
        %v998 = vadd.f32 0.0, %v997
        %999 = vmatprep.mubr.f32.mxu0 %v254
        %1000 = vmatmul.mubr.f32.gmra.mrb[0].mxu0 %v222
        %v1001 = vpop.f32.mrb[0].mxu0
        %v1002 = vadd.f32 0.0, %v1001
        %v1003 = vpop.f32.mrb[0].mxu0
        %v1004 = vadd.f32 0.0, %v1003
        %1005 = vmatprep.mubr.f32.mxu0 %v255
        %1006 = vmatmul.mubr.f32.gmra.mrb[0].mxu0 %v223
        %v1007 = vpop.f32.mrb[0].mxu0
        %v1008 = vadd.f32 0.0, %v1007
        %v1009 = vpop.f32.mrb[0].mxu0
        %v1010 = vadd.f32 0.0, %v1009
        %1011 = vmatprep.mubr.f32.mxu0 %v256
        %1012 = vmatmul.mubr.f32.gmra.mrb[0].mxu0 %v224
        %v1013 = vpop.f32.mrb[0].mxu0
        %v1014 = vadd.f32 0.0, %v1013
        %v1015 = vpop.f32.mrb[0].mxu0
        %v1016 = vadd.f32 0.0, %v1015
        %1017 = vmatprep.mubr.f32.mxu0 %v257
        %1018 = vmatmul.mubr.f32.gmra.mrb[0].mxu0 %v225
        %v1019 = vpop.f32.mrb[0].mxu0
        %v1020 = vadd.f32 0.0, %v1019
        %v1021 = vpop.f32.mrb[0].mxu0
        %v1022 = vadd.f32 0.0, %v1021
        %1023 = vmatprep.mubr.f32.mxu0 %v258
        %1024 = vmatmul.mubr.f32.gmra.mrb[0].mxu0 %v226
        %v1025 = vpop.f32.mrb[0].mxu0
        %v1026 = vadd.f32 0.0, %v1025
        %v1027 = vpop.f32.mrb[0].mxu0
        %v1028 = vadd.f32 0.0, %v1027
        %1029 = vdwg.mxu0
        %1030 = vmatprep.subr.mxu0 %v550
        %1031 = vmatpush1.msra.mxu0 %v549
        %1032 = vmatprep.subr.mxu0 %v552
        %1033 = vmatpush1.msra.mxu0 %v551
        %1034 = vmatprep.subr.mxu0 %v554
        %1035 = vmatpush1.msra.mxu0 %v553
        %1036 = vmatprep.subr.mxu0 %v556
        %1037 = vmatpush1.msra.mxu0 %v555
        %1038 = vmatprep.subr.mxu0 %v558
        %1039 = vmatpush1.msra.mxu0 %v557
        %1040 = vmatprep.subr.mxu0 %v560
        %1041 = vmatpush1.msra.mxu0 %v559
        %1042 = vmatprep.subr.mxu0 %v562
        %1043 = vmatpush1.msra.mxu0 %v561
        %1044 = vmatprep.subr.mxu0 %v564
        %1045 = vmatpush1.msra.mxu0 %v563
        %1046 = vmatprep.subr.mxu0 %v566
        %1047 = vmatpush1.msra.mxu0 %v565
        %1048 = vmatprep.subr.mxu0 %v568
        %1049 = vmatpush1.msra.mxu0 %v567
        %1050 = vmatprep.subr.mxu0 %v570
        %1051 = vmatpush1.msra.mxu0 %v569
        %1052 = vmatprep.subr.mxu0 %v572
        %1053 = vmatpush1.msra.mxu0 %v571
        %1054 = vmatprep.subr.mxu0 %v574
        %1055 = vmatpush1.msra.mxu0 %v573
        %1056 = vmatprep.subr.mxu0 %v576
        %1057 = vmatpush1.msra.mxu0 %v575
        %1058 = vmatprep.subr.mxu0 %v578
        %1059 = vmatpush1.msra.mxu0 %v577
        %1060 = vmatprep.subr.mxu0 %v580
        %1061 = vmatpush1.msra.mxu0 %v579
        %1062 = vmatprep.subr.mxu0 %v582
        %1063 = vmatpush1.msra.mxu0 %v581
        %1064 = vmatprep.subr.mxu0 %v584
        %1065 = vmatpush1.msra.mxu0 %v583
        %1066 = vmatprep.subr.mxu0 %v586
        %1067 = vmatpush1.msra.mxu0 %v585
        %1068 = vmatprep.subr.mxu0 %v588
        %1069 = vmatpush1.msra.mxu0 %v587
        %1070 = vmatprep.subr.mxu0 %v590
        %1071 = vmatpush1.msra.mxu0 %v589
        %1072 = vmatprep.subr.mxu0 %v592
        %1073 = vmatpush1.msra.mxu0 %v591
        %1074 = vmatprep.subr.mxu0 %v594
        %1075 = vmatpush1.msra.mxu0 %v593
        %1076 = vmatprep.subr.mxu0 %v596
        %1077 = vmatpush1.msra.mxu0 %v595
        %1078 = vmatprep.subr.mxu0 %v598
        %1079 = vmatpush1.msra.mxu0 %v597
        %1080 = vmatprep.subr.mxu0 %v600
        %1081 = vmatpush1.msra.mxu0 %v599
        %1082 = vmatprep.subr.mxu0 %v602
        %1083 = vmatpush1.msra.mxu0 %v601
        %1084 = vmatprep.subr.mxu0 %v604
        %1085 = vmatpush1.msra.mxu0 %v603
        %1086 = vmatprep.subr.mxu0 %v606
        %1087 = vmatpush1.msra.mxu0 %v605
        %1088 = vmatprep.subr.mxu0 %v608
        %1089 = vmatpush1.msra.mxu0 %v607
        %1090 = vmatprep.subr.mxu0 %v610
        %1091 = vmatpush1.msra.mxu0 %v609
        %1092 = vmatprep.subr.mxu0 %v612
        %1093 = vmatpush1.msra.mxu0 %v611
        %1094 = vmatprep.mubr.f32.mxu0 %v292
        %1095 = vmatmul.mubr.f32.gmra.mrb[0].mxu0 %v259
        %v1096 = vpop.f32.mrb[0].mxu0
        %v1097 = vadd.f32 %v840, %v1096
        %v1098 = vpop.f32.mrb[0].mxu0
        %v1099 = vadd.f32 %v842, %v1098
        %1100 = vmatprep.mubr.f32.mxu0 %v293
        %1101 = vmatmul.mubr.f32.gmra.mrb[0].mxu0 %v260
        %v1102 = vpop.f32.mrb[0].mxu0
        %v1103 = vadd.f32 %v846, %v1102
        %v1104 = vpop.f32.mrb[0].mxu0
        %v1105 = vadd.f32 %v848, %v1104
        %1106 = vmatprep.mubr.f32.mxu0 %v294
        %1107 = vmatmul.mubr.f32.gmra.mrb[0].mxu0 %v261
        %v1108 = vpop.f32.mrb[0].mxu0
        %v1109 = vadd.f32 %v852, %v1108
        %v1110 = vpop.f32.mrb[0].mxu0
        %v1111 = vadd.f32 %v854, %v1110
        %1112 = vmatprep.mubr.f32.mxu0 %v295
        %1113 = vmatmul.mubr.f32.gmra.mrb[0].mxu0 %v262
        %v1114 = vpop.f32.mrb[0].mxu0
        %v1115 = vadd.f32 %v858, %v1114
        %v1116 = vpop.f32.mrb[0].mxu0
        %v1117 = vadd.f32 %v860, %v1116
        %1118 = vmatprep.mubr.f32.mxu0 %v296
        %1119 = vmatmul.mubr.f32.gmra.mrb[0].mxu0 %v263
        %v1120 = vpop.f32.mrb[0].mxu0
        %v1121 = vadd.f32 %v864, %v1120
        %v1122 = vpop.f32.mrb[0].mxu0
        %v1123 = vadd.f32 %v866, %v1122
        %1124 = vmatprep.mubr.f32.mxu0 %v297
        %1125 = vmatmul.mubr.f32.gmra.mrb[0].mxu0 %v264
        %v1126 = vpop.f32.mrb[0].mxu0
        %v1127 = vadd.f32 %v870, %v1126
        %v1128 = vpop.f32.mrb[0].mxu0
        %v1129 = vadd.f32 %v872, %v1128
        %1130 = vmatprep.mubr.f32.mxu0 %v298
        %1131 = vmatmul.mubr.f32.gmra.mrb[0].mxu0 %v265
        %v1132 = vpop.f32.mrb[0].mxu0
        %v1133 = vadd.f32 %v876, %v1132
        %v1134 = vpop.f32.mrb[0].mxu0
        %v1135 = vadd.f32 %v878, %v1134
        %1136 = vmatprep.mubr.f32.mxu0 %v299
        %1137 = vmatmul.mubr.f32.gmra.mrb[0].mxu0 %v266
        %v1138 = vpop.f32.mrb[0].mxu0
        %v1139 = vadd.f32 %v882, %v1138
        %v1140 = vpop.f32.mrb[0].mxu0
        %v1141 = vadd.f32 %v884, %v1140
        %1142 = vmatprep.mubr.f32.mxu0 %v300
        %1143 = vmatmul.mubr.f32.gmra.mrb[0].mxu0 %v267
        %v1144 = vpop.f32.mrb[0].mxu0
        %v1145 = vadd.f32 %v888, %v1144
        %v1146 = vpop.f32.mrb[0].mxu0
        %v1147 = vadd.f32 %v890, %v1146
        %1148 = vmatprep.mubr.f32.mxu0 %v301
        %1149 = vmatmul.mubr.f32.gmra.mrb[0].mxu0 %v268
        %v1150 = vpop.f32.mrb[0].mxu0
        %v1151 = vadd.f32 %v894, %v1150
        %v1152 = vpop.f32.mrb[0].mxu0
        %v1153 = vadd.f32 %v896, %v1152
        %1154 = vmatprep.mubr.f32.mxu0 %v302
        %1155 = vmatmul.mubr.f32.gmra.mrb[0].mxu0 %v269
        %v1156 = vpop.f32.mrb[0].mxu0
        %v1157 = vadd.f32 %v900, %v1156
        %v1158 = vpop.f32.mrb[0].mxu0
        %v1159 = vadd.f32 %v902, %v1158
        %1160 = vmatprep.mubr.f32.mxu0 %v303
        %1161 = vmatmul.mubr.f32.gmra.mrb[0].mxu0 %v270
        %v1162 = vpop.f32.mrb[0].mxu0
        %v1163 = vadd.f32 %v906, %v1162
        %v1164 = vpop.f32.mrb[0].mxu0
        %v1165 = vadd.f32 %v908, %v1164
        %1166 = vmatprep.mubr.f32.mxu0 %v304
        %1167 = vmatmul.mubr.f32.gmra.mrb[0].mxu0 %v271
        %v1168 = vpop.f32.mrb[0].mxu0
        %v1169 = vadd.f32 %v912, %v1168
        %v1170 = vpop.f32.mrb[0].mxu0
        %v1171 = vadd.f32 %v914, %v1170
        %1172 = vmatprep.mubr.f32.mxu0 %v305
        %1173 = vmatmul.mubr.f32.gmra.mrb[0].mxu0 %v272
        %v1174 = vpop.f32.mrb[0].mxu0
        %v1175 = vadd.f32 %v918, %v1174
        %v1176 = vpop.f32.mrb[0].mxu0
        %v1177 = vadd.f32 %v920, %v1176
        %1178 = vmatprep.mubr.f32.mxu0 %v306
        %1179 = vmatmul.mubr.f32.gmra.mrb[0].mxu0 %v273
        %v1180 = vpop.f32.mrb[0].mxu0
        %v1181 = vadd.f32 %v924, %v1180
        %v1182 = vpop.f32.mrb[0].mxu0
        %v1183 = vadd.f32 %v926, %v1182
        %1184 = vmatprep.mubr.f32.mxu0 %v307
        %1185 = vmatmul.mubr.f32.gmra.mrb[0].mxu0 %v274
        %v1186 = vpop.f32.mrb[0].mxu0
        %v1187 = vadd.f32 %v930, %v1186
        %v1188 = vpop.f32.mrb[0].mxu0
        %v1189 = vadd.f32 %v932, %v1188
        %1190 = vmatprep.mubr.f32.mxu0 %v308
        %1191 = vmatmul.mubr.f32.gmra.mrb[0].mxu0 %v275
        %v1192 = vpop.f32.mrb[0].mxu0
        %v1193 = vadd.f32 %v936, %v1192
        %v1194 = vpop.f32.mrb[0].mxu0
        %v1195 = vadd.f32 %v938, %v1194
        %1196 = vmatprep.mubr.f32.mxu0 %v309
        %1197 = vmatmul.mubr.f32.gmra.mrb[0].mxu0 %v276
        %v1198 = vpop.f32.mrb[0].mxu0
        %v1199 = vadd.f32 %v942, %v1198
        %v1200 = vpop.f32.mrb[0].mxu0
        %v1201 = vadd.f32 %v944, %v1200
        %1202 = vmatprep.mubr.f32.mxu0 %v310
        %1203 = vmatmul.mubr.f32.gmra.mrb[0].mxu0 %v277
        %v1204 = vpop.f32.mrb[0].mxu0
        %v1205 = vadd.f32 %v948, %v1204
        %v1206 = vpop.f32.mrb[0].mxu0
        %v1207 = vadd.f32 %v950, %v1206
        %1208 = vmatprep.mubr.f32.mxu0 %v311
        %1209 = vmatmul.mubr.f32.gmra.mrb[0].mxu0 %v278
        %v1210 = vpop.f32.mrb[0].mxu0
        %v1211 = vadd.f32 %v954, %v1210
        %v1212 = vpop.f32.mrb[0].mxu0
        %v1213 = vadd.f32 %v956, %v1212
        %1214 = vmatprep.mubr.f32.mxu0 %v312
        %1215 = vmatmul.mubr.f32.gmra.mrb[0].mxu0 %v279
        %v1216 = vpop.f32.mrb[0].mxu0
        %v1217 = vadd.f32 %v960, %v1216
        %v1218 = vpop.f32.mrb[0].mxu0
        %v1219 = vadd.f32 %v962, %v1218
        %1220 = vmatprep.mubr.f32.mxu0 %v313
        %1221 = vmatmul.mubr.f32.gmra.mrb[0].mxu0 %v280
        %v1222 = vpop.f32.mrb[0].mxu0
        %v1223 = vadd.f32 %v966, %v1222
        %v1224 = vpop.f32.mrb[0].mxu0
        %v1225 = vadd.f32 %v968, %v1224
        %1226 = vmatprep.mubr.f32.mxu0 %v314
        %1227 = vmatmul.mubr.f32.gmra.mrb[0].mxu0 %v281
        %v1228 = vpop.f32.mrb[0].mxu0
        %v1229 = vadd.f32 %v972, %v1228
        %v1230 = vpop.f32.mrb[0].mxu0
        %v1231 = vadd.f32 %v974, %v1230
        %1232 = vmatprep.mubr.f32.mxu0 %v315
        %1233 = vmatmul.mubr.f32.gmra.mrb[0].mxu0 %v282
        %v1234 = vpop.f32.mrb[0].mxu0
        %v1235 = vadd.f32 %v978, %v1234
        %v1236 = vpop.f32.mrb[0].mxu0
        %v1237 = vadd.f32 %v980, %v1236
        %1238 = vmatprep.mubr.f32.mxu0 %v316
        %1239 = vmatmul.mubr.f32.gmra.mrb[0].mxu0 %v283
        %v1240 = vpop.f32.mrb[0].mxu0
        %v1241 = vadd.f32 %v984, %v1240
        %v1242 = vpop.f32.mrb[0].mxu0
        %v1243 = vadd.f32 %v986, %v1242
        %1244 = vmatprep.mubr.f32.mxu0 %v317
        %1245 = vmatmul.mubr.f32.gmra.mrb[0].mxu0 %v284
        %v1246 = vpop.f32.mrb[0].mxu0
        %v1247 = vadd.f32 %v990, %v1246
        %v1248 = vpop.f32.mrb[0].mxu0
        %v1249 = vadd.f32 %v992, %v1248
        %1250 = vmatprep.mubr.f32.mxu0 %v318
        %1251 = vmatmul.mubr.f32.gmra.mrb[0].mxu0 %v285
        %v1252 = vpop.f32.mrb[0].mxu0
        %v1253 = vadd.f32 %v996, %v1252
        %v1254 = vpop.f32.mrb[0].mxu0
        %v1255 = vadd.f32 %v998, %v1254
        %1256 = vmatprep.mubr.f32.mxu0 %v319
        %1257 = vmatmul.mubr.f32.gmra.mrb[0].mxu0 %v286
        %v1258 = vpop.f32.mrb[0].mxu0
        %v1259 = vadd.f32 %v1002, %v1258
        %v1260 = vpop.f32.mrb[0].mxu0
        %v1261 = vadd.f32 %v1004, %v1260
        %1262 = vmatprep.mubr.f32.mxu0 %v320
        %1263 = vmatmul.mubr.f32.gmra.mrb[0].mxu0 %v287
        %v1264 = vpop.f32.mrb[0].mxu0
        %v1265 = vadd.f32 %v1008, %v1264
        %v1266 = vpop.f32.mrb[0].mxu0
        %v1267 = vadd.f32 %v1010, %v1266
        %1268 = vmatprep.mubr.f32.mxu0 %v321
        %1269 = vmatmul.mubr.f32.gmra.mrb[0].mxu0 %v288
        %v1270 = vpop.f32.mrb[0].mxu0
        %v1271 = vadd.f32 %v1014, %v1270
        %v1272 = vpop.f32.mrb[0].mxu0
        %v1273 = vadd.f32 %v1016, %v1272
        %1274 = vmatprep.mubr.f32.mxu0 %v322
        %1275 = vmatmul.mubr.f32.gmra.mrb[0].mxu0 %v289
        %v1276 = vpop.f32.mrb[0].mxu0
        %v1277 = vadd.f32 %v1020, %v1276
        %v1278 = vpop.f32.mrb[0].mxu0
        %v1279 = vadd.f32 %v1022, %v1278
        %1280 = vmatprep.mubr.f32.mxu0 %v323
        %1281 = vmatmul.mubr.f32.gmra.mrb[0].mxu0 %v290
        %v1282 = vpop.f32.mrb[0].mxu0
        %v1283 = vadd.f32 %v1026, %v1282
        %v1284 = vpop.f32.mrb[0].mxu0
        %v1285 = vadd.f32 %v1028, %v1284
        %1286 = vdwg.mxu0
        %1287 = vmatprep.subr.mxu0 %v614
        %1288 = vmatpush1.msra.mxu0 %v613
        %1289 = vmatprep.subr.mxu0 %v616
        %1290 = vmatpush1.msra.mxu0 %v615
        %1291 = vmatprep.subr.mxu0 %v618
        %1292 = vmatpush1.msra.mxu0 %v617
        %1293 = vmatprep.subr.mxu0 %v620
        %1294 = vmatpush1.msra.mxu0 %v619
        %1295 = vmatprep.subr.mxu0 %v622
        %1296 = vmatpush1.msra.mxu0 %v621
        %1297 = vmatprep.subr.mxu0 %v624
        %1298 = vmatpush1.msra.mxu0 %v623
        %1299 = vmatprep.subr.mxu0 %v626
        %1300 = vmatpush1.msra.mxu0 %v625
        %1301 = vmatprep.subr.mxu0 %v628
        %1302 = vmatpush1.msra.mxu0 %v627
        %1303 = vmatprep.subr.mxu0 %v630
        %1304 = vmatpush1.msra.mxu0 %v629
        %1305 = vmatprep.subr.mxu0 %v632
        %1306 = vmatpush1.msra.mxu0 %v631
        %1307 = vmatprep.subr.mxu0 %v634
        %1308 = vmatpush1.msra.mxu0 %v633
        %1309 = vmatprep.subr.mxu0 %v636
        %1310 = vmatpush1.msra.mxu0 %v635
        %1311 = vmatprep.subr.mxu0 %v638
        %1312 = vmatpush1.msra.mxu0 %v637
        %1313 = vmatprep.subr.mxu0 %v640
        %1314 = vmatpush1.msra.mxu0 %v639
        %1315 = vmatprep.subr.mxu0 %v642
        %1316 = vmatpush1.msra.mxu0 %v641
        %1317 = vmatprep.subr.mxu0 %v644
        %1318 = vmatpush1.msra.mxu0 %v643
        %1319 = vmatprep.subr.mxu0 %v646
        %1320 = vmatpush1.msra.mxu0 %v645
        %1321 = vmatprep.subr.mxu0 %v648
        %1322 = vmatpush1.msra.mxu0 %v647
        %1323 = vmatprep.subr.mxu0 %v650
        %1324 = vmatpush1.msra.mxu0 %v649
        %1325 = vmatprep.subr.mxu0 %v652
        %1326 = vmatpush1.msra.mxu0 %v651
        %1327 = vmatprep.subr.mxu0 %v654
        %1328 = vmatpush1.msra.mxu0 %v653
        %1329 = vmatprep.subr.mxu0 %v656
        %1330 = vmatpush1.msra.mxu0 %v655
        %1331 = vmatprep.subr.mxu0 %v658
        %1332 = vmatpush1.msra.mxu0 %v657
        %1333 = vmatprep.subr.mxu0 %v660
        %1334 = vmatpush1.msra.mxu0 %v659
        %1335 = vmatprep.subr.mxu0 %v662
        %1336 = vmatpush1.msra.mxu0 %v661
        %1337 = vmatprep.subr.mxu0 %v664
        %1338 = vmatpush1.msra.mxu0 %v663
        %1339 = vmatprep.subr.mxu0 %v666
        %1340 = vmatpush1.msra.mxu0 %v665
        %1341 = vmatprep.subr.mxu0 %v668
        %1342 = vmatpush1.msra.mxu0 %v667
        %1343 = vmatprep.subr.mxu0 %v670
        %1344 = vmatpush1.msra.mxu0 %v669
        %1345 = vmatprep.subr.mxu0 %v672
        %1346 = vmatpush1.msra.mxu0 %v671
        %1347 = vmatprep.subr.mxu0 %v674
        %1348 = vmatpush1.msra.mxu0 %v673
        %1349 = vmatprep.subr.mxu0 %v676
        %1350 = vmatpush1.msra.mxu0 %v675
        %1351 = vmatprep.mubr.f32.mxu0 %v356
        %1352 = vmatmul.mubr.f32.gmra.mrb[0].mxu0 %v324
        %v1353 = vpop.f32.mrb[0].mxu0
        %v1354 = vadd.f32 %v1097, %v1353
        %v1355 = vpop.f32.mrb[0].mxu0
        %v1356 = vadd.f32 %v1099, %v1355
        %1357 = vmatprep.mubr.f32.mxu0 %v357
        %1358 = vmatmul.mubr.f32.gmra.mrb[0].mxu0 %v325
        %v1359 = vpop.f32.mrb[0].mxu0
        %v1360 = vadd.f32 %v1103, %v1359
        %v1361 = vpop.f32.mrb[0].mxu0
        %v1362 = vadd.f32 %v1105, %v1361
        %1363 = vmatprep.mubr.f32.mxu0 %v358
        %1364 = vmatmul.mubr.f32.gmra.mrb[0].mxu0 %v326
        %v1365 = vpop.f32.mrb[0].mxu0
        %v1366 = vadd.f32 %v1109, %v1365
        %v1367 = vpop.f32.mrb[0].mxu0
        %v1368 = vadd.f32 %v1111, %v1367
        %1369 = vmatprep.mubr.f32.mxu0 %v359
        %1370 = vmatmul.mubr.f32.gmra.mrb[0].mxu0 %v327
        %v1371 = vpop.f32.mrb[0].mxu0
        %v1372 = vadd.f32 %v1115, %v1371
        %v1373 = vpop.f32.mrb[0].mxu0
        %v1374 = vadd.f32 %v1117, %v1373
        %1375 = vmatprep.mubr.f32.mxu0 %v360
        %1376 = vmatmul.mubr.f32.gmra.mrb[0].mxu0 %v328
        %v1377 = vpop.f32.mrb[0].mxu0
        %v1378 = vadd.f32 %v1121, %v1377
        %v1379 = vpop.f32.mrb[0].mxu0
        %v1380 = vadd.f32 %v1123, %v1379
        %1381 = vmatprep.mubr.f32.mxu0 %v361
        %1382 = vmatmul.mubr.f32.gmra.mrb[0].mxu0 %v329
        %v1383 = vpop.f32.mrb[0].mxu0
        %v1384 = vadd.f32 %v1127, %v1383
        %v1385 = vpop.f32.mrb[0].mxu0
        %v1386 = vadd.f32 %v1129, %v1385
        %1387 = vmatprep.mubr.f32.mxu0 %v362
        %1388 = vmatmul.mubr.f32.gmra.mrb[0].mxu0 %v330
        %v1389 = vpop.f32.mrb[0].mxu0
        %v1390 = vadd.f32 %v1133, %v1389
        %v1391 = vpop.f32.mrb[0].mxu0
        %v1392 = vadd.f32 %v1135, %v1391
        %1393 = vmatprep.mubr.f32.mxu0 %v363
        %1394 = vmatmul.mubr.f32.gmra.mrb[0].mxu0 %v331
        %v1395 = vpop.f32.mrb[0].mxu0
        %v1396 = vadd.f32 %v1139, %v1395
        %v1397 = vpop.f32.mrb[0].mxu0
        %v1398 = vadd.f32 %v1141, %v1397
        %1399 = vmatprep.mubr.f32.mxu0 %v364
        %1400 = vmatmul.mubr.f32.gmra.mrb[0].mxu0 %v332
        %v1401 = vpop.f32.mrb[0].mxu0
        %v1402 = vadd.f32 %v1145, %v1401
        %v1403 = vpop.f32.mrb[0].mxu0
        %v1404 = vadd.f32 %v1147, %v1403
        %1405 = vmatprep.mubr.f32.mxu0 %v365
        %1406 = vmatmul.mubr.f32.gmra.mrb[0].mxu0 %v333
        %v1407 = vpop.f32.mrb[0].mxu0
        %v1408 = vadd.f32 %v1151, %v1407
        %v1409 = vpop.f32.mrb[0].mxu0
        %v1410 = vadd.f32 %v1153, %v1409
        %1411 = vmatprep.mubr.f32.mxu0 %v366
        %1412 = vmatmul.mubr.f32.gmra.mrb[0].mxu0 %v334
        %v1413 = vpop.f32.mrb[0].mxu0
        %v1414 = vadd.f32 %v1157, %v1413
        %v1415 = vpop.f32.mrb[0].mxu0
        %v1416 = vadd.f32 %v1159, %v1415
        %1417 = vmatprep.mubr.f32.mxu0 %v367
        %1418 = vmatmul.mubr.f32.gmra.mrb[0].mxu0 %v335
        %v1419 = vpop.f32.mrb[0].mxu0
        %v1420 = vadd.f32 %v1163, %v1419
        %v1421 = vpop.f32.mrb[0].mxu0
        %v1422 = vadd.f32 %v1165, %v1421
        %1423 = vmatprep.mubr.f32.mxu0 %v368
        %1424 = vmatmul.mubr.f32.gmra.mrb[0].mxu0 %v336
        %v1425 = vpop.f32.mrb[0].mxu0
        %v1426 = vadd.f32 %v1169, %v1425
        %v1427 = vpop.f32.mrb[0].mxu0
        %v1428 = vadd.f32 %v1171, %v1427
        %1429 = vmatprep.mubr.f32.mxu0 %v369
        %1430 = vmatmul.mubr.f32.gmra.mrb[0].mxu0 %v337
        %v1431 = vpop.f32.mrb[0].mxu0
        %v1432 = vadd.f32 %v1175, %v1431
        %v1433 = vpop.f32.mrb[0].mxu0
        %v1434 = vadd.f32 %v1177, %v1433
        %1435 = vmatprep.mubr.f32.mxu0 %v370
        %1436 = vmatmul.mubr.f32.gmra.mrb[0].mxu0 %v338
        %v1437 = vpop.f32.mrb[0].mxu0
        %v1438 = vadd.f32 %v1181, %v1437
        %v1439 = vpop.f32.mrb[0].mxu0
        %v1440 = vadd.f32 %v1183, %v1439
        %1441 = vmatprep.mubr.f32.mxu0 %v371
        %1442 = vmatmul.mubr.f32.gmra.mrb[0].mxu0 %v339
        %v1443 = vpop.f32.mrb[0].mxu0
        %v1444 = vadd.f32 %v1187, %v1443
        %v1445 = vpop.f32.mrb[0].mxu0
        %v1446 = vadd.f32 %v1189, %v1445
        %1447 = vmatprep.mubr.f32.mxu0 %v372
        %1448 = vmatmul.mubr.f32.gmra.mrb[0].mxu0 %v340
        %v1449 = vpop.f32.mrb[0].mxu0
        %v1450 = vadd.f32 %v1193, %v1449
        %v1451 = vpop.f32.mrb[0].mxu0
        %v1452 = vadd.f32 %v1195, %v1451
        %1453 = vmatprep.mubr.f32.mxu0 %v373
        %1454 = vmatmul.mubr.f32.gmra.mrb[0].mxu0 %v341
        %v1455 = vpop.f32.mrb[0].mxu0
        %v1456 = vadd.f32 %v1199, %v1455
        %v1457 = vpop.f32.mrb[0].mxu0
        %v1458 = vadd.f32 %v1201, %v1457
        %1459 = vmatprep.mubr.f32.mxu0 %v374
        %1460 = vmatmul.mubr.f32.gmra.mrb[0].mxu0 %v342
        %v1461 = vpop.f32.mrb[0].mxu0
        %v1462 = vadd.f32 %v1205, %v1461
        %v1463 = vpop.f32.mrb[0].mxu0
        %v1464 = vadd.f32 %v1207, %v1463
        %1465 = vmatprep.mubr.f32.mxu0 %v375
        %1466 = vmatmul.mubr.f32.gmra.mrb[0].mxu0 %v343
        %v1467 = vpop.f32.mrb[0].mxu0
        %v1468 = vadd.f32 %v1211, %v1467
        %v1469 = vpop.f32.mrb[0].mxu0
        %v1470 = vadd.f32 %v1213, %v1469
        %1471 = vmatprep.mubr.f32.mxu0 %v376
        %1472 = vmatmul.mubr.f32.gmra.mrb[0].mxu0 %v344
        %v1473 = vpop.f32.mrb[0].mxu0
        %v1474 = vadd.f32 %v1217, %v1473
        %v1475 = vpop.f32.mrb[0].mxu0
        %v1476 = vadd.f32 %v1219, %v1475
        %1477 = vmatprep.mubr.f32.mxu0 %v377
        %1478 = vmatmul.mubr.f32.gmra.mrb[0].mxu0 %v345
        %v1479 = vpop.f32.mrb[0].mxu0
        %v1480 = vadd.f32 %v1223, %v1479
        %v1481 = vpop.f32.mrb[0].mxu0
        %v1482 = vadd.f32 %v1225, %v1481
        %1483 = vmatprep.mubr.f32.mxu0 %v378
        %1484 = vmatmul.mubr.f32.gmra.mrb[0].mxu0 %v346
        %v1485 = vpop.f32.mrb[0].mxu0
        %v1486 = vadd.f32 %v1229, %v1485
        %v1487 = vpop.f32.mrb[0].mxu0
        %v1488 = vadd.f32 %v1231, %v1487
        %1489 = vmatprep.mubr.f32.mxu0 %v379
        %1490 = vmatmul.mubr.f32.gmra.mrb[0].mxu0 %v347
        %v1491 = vpop.f32.mrb[0].mxu0
        %v1492 = vadd.f32 %v1235, %v1491
        %v1493 = vpop.f32.mrb[0].mxu0
        %v1494 = vadd.f32 %v1237, %v1493
        %1495 = vmatprep.mubr.f32.mxu0 %v380
        %1496 = vmatmul.mubr.f32.gmra.mrb[0].mxu0 %v348
        %v1497 = vpop.f32.mrb[0].mxu0
        %v1498 = vadd.f32 %v1241, %v1497
        %v1499 = vpop.f32.mrb[0].mxu0
        %v1500 = vadd.f32 %v1243, %v1499
        %1501 = vmatprep.mubr.f32.mxu0 %v381
        %1502 = vmatmul.mubr.f32.gmra.mrb[0].mxu0 %v349
        %v1503 = vpop.f32.mrb[0].mxu0
        %v1504 = vadd.f32 %v1247, %v1503
        %v1505 = vpop.f32.mrb[0].mxu0
        %v1506 = vadd.f32 %v1249, %v1505
        %1507 = vmatprep.mubr.f32.mxu0 %v382
        %1508 = vmatmul.mubr.f32.gmra.mrb[0].mxu0 %v350
        %v1509 = vpop.f32.mrb[0].mxu0
        %v1510 = vadd.f32 %v1253, %v1509
        %v1511 = vpop.f32.mrb[0].mxu0
        %v1512 = vadd.f32 %v1255, %v1511
        %1513 = vmatprep.mubr.f32.mxu0 %v383
        %1514 = vmatmul.mubr.f32.gmra.mrb[0].mxu0 %v351
        %v1515 = vpop.f32.mrb[0].mxu0
        %v1516 = vadd.f32 %v1259, %v1515
        %v1517 = vpop.f32.mrb[0].mxu0
        %v1518 = vadd.f32 %v1261, %v1517
        %1519 = vmatprep.mubr.f32.mxu0 %v384
        %1520 = vmatmul.mubr.f32.gmra.mrb[0].mxu0 %v352
        %v1521 = vpop.f32.mrb[0].mxu0
        %v1522 = vadd.f32 %v1265, %v1521
        %v1523 = vpop.f32.mrb[0].mxu0
        %v1524 = vadd.f32 %v1267, %v1523
        %1525 = vmatprep.mubr.f32.mxu0 %v385
        %1526 = vmatmul.mubr.f32.gmra.mrb[0].mxu0 %v353
        %v1527 = vpop.f32.mrb[0].mxu0
        %v1528 = vadd.f32 %v1271, %v1527
        %v1529 = vpop.f32.mrb[0].mxu0
        %v1530 = vadd.f32 %v1273, %v1529
        %1531 = vmatprep.mubr.f32.mxu0 %v386
        %1532 = vmatmul.mubr.f32.gmra.mrb[0].mxu0 %v354
        %v1533 = vpop.f32.mrb[0].mxu0
        %v1534 = vadd.f32 %v1277, %v1533
        %v1535 = vpop.f32.mrb[0].mxu0
        %v1536 = vadd.f32 %v1279, %v1535
        %1537 = vmatprep.mubr.f32.mxu0 %v387
        %1538 = vmatmul.mubr.f32.gmra.mrb[0].mxu0 %v355
        %v1539 = vpop.f32.mrb[0].mxu0
        %v1540 = vadd.f32 %v1283, %v1539
        %v1541 = vpop.f32.mrb[0].mxu0
        %v1542 = vadd.f32 %v1285, %v1541
        %1543 = vdwg.mxu0
        %1544 = vmatprep.subr.mxu0 %v678
        %1545 = vmatpush1.msra.mxu0 %v677
        %1546 = vmatprep.subr.mxu0 %v680
        %1547 = vmatpush1.msra.mxu0 %v679
        %1548 = vmatprep.subr.mxu0 %v682
        %1549 = vmatpush1.msra.mxu0 %v681
        %1550 = vmatprep.subr.mxu0 %v684
        %1551 = vmatpush1.msra.mxu0 %v683
        %1552 = vmatprep.subr.mxu0 %v686
        %1553 = vmatpush1.msra.mxu0 %v685
        %1554 = vmatprep.subr.mxu0 %v688
        %1555 = vmatpush1.msra.mxu0 %v687
        %1556 = vmatprep.subr.mxu0 %v690
        %1557 = vmatpush1.msra.mxu0 %v689
        %1558 = vmatprep.subr.mxu0 %v692
        %1559 = vmatpush1.msra.mxu0 %v691
        %1560 = vmatprep.subr.mxu0 %v694
        %1561 = vmatpush1.msra.mxu0 %v693
        %1562 = vmatprep.subr.mxu0 %v696
        %1563 = vmatpush1.msra.mxu0 %v695
        %1564 = vmatprep.subr.mxu0 %v698
        %1565 = vmatpush1.msra.mxu0 %v697
        %1566 = vmatprep.subr.mxu0 %v700
        %1567 = vmatpush1.msra.mxu0 %v699
        %1568 = vmatprep.subr.mxu0 %v702
        %1569 = vmatpush1.msra.mxu0 %v701
        %1570 = vmatprep.subr.mxu0 %v704
        %1571 = vmatpush1.msra.mxu0 %v703
        %1572 = vmatprep.subr.mxu0 %v706
        %1573 = vmatpush1.msra.mxu0 %v705
        %1574 = vmatprep.subr.mxu0 %v708
        %1575 = vmatpush1.msra.mxu0 %v707
        %1576 = vmatprep.subr.mxu0 %v710
        %1577 = vmatpush1.msra.mxu0 %v709
        %1578 = vmatprep.subr.mxu0 %v712
        %1579 = vmatpush1.msra.mxu0 %v711
        %1580 = vmatprep.subr.mxu0 %v714
        %1581 = vmatpush1.msra.mxu0 %v713
        %1582 = vmatprep.subr.mxu0 %v716
        %1583 = vmatpush1.msra.mxu0 %v715
        %1584 = vmatprep.subr.mxu0 %v718
        %1585 = vmatpush1.msra.mxu0 %v717
        %1586 = vmatprep.subr.mxu0 %v720
        %1587 = vmatpush1.msra.mxu0 %v719
        %1588 = vmatprep.subr.mxu0 %v722
        %1589 = vmatpush1.msra.mxu0 %v721
        %1590 = vmatprep.subr.mxu0 %v724
        %1591 = vmatpush1.msra.mxu0 %v723
        %1592 = vmatprep.subr.mxu0 %v726
        %1593 = vmatpush1.msra.mxu0 %v725
        %1594 = vmatprep.subr.mxu0 %v728
        %1595 = vmatpush1.msra.mxu0 %v727
        %1596 = vmatprep.subr.mxu0 %v730
        %1597 = vmatpush1.msra.mxu0 %v729
        %1598 = vmatprep.subr.mxu0 %v732
        %1599 = vmatpush1.msra.mxu0 %v731
        %1600 = vmatprep.subr.mxu0 %v734
        %1601 = vmatpush1.msra.mxu0 %v733
        %1602 = vmatprep.subr.mxu0 %v736
        %1603 = vmatpush1.msra.mxu0 %v735
        %1604 = vmatprep.subr.mxu0 %v738
        %1605 = vmatpush1.msra.mxu0 %v737
        %1606 = vmatprep.subr.mxu0 %v740
        %1607 = vmatpush1.msra.mxu0 %v739
        %1608 = vmatprep.mubr.f32.mxu0 %v421
        %1609 = vmatmul.mubr.f32.gmra.mrb[0].mxu0 %v389
        %v1610 = vpop.f32.mrb[0].mxu0
        %v1611 = vadd.f32 %v1354, %v1610
        %v1612 = vpop.f32.mrb[0].mxu0
        %v1613 = vadd.f32 %v1356, %v1612
        %1614 = vmatprep.mubr.f32.mxu0 %v422
        %1615 = vmatmul.mubr.f32.gmra.mrb[0].mxu0 %v390
        %v1616 = vpop.f32.mrb[0].mxu0
        %v1617 = vadd.f32 %v1360, %v1616
        %v1618 = vpop.f32.mrb[0].mxu0
        %v1619 = vadd.f32 %v1362, %v1618
        %1620 = vmatprep.mubr.f32.mxu0 %v423
        %1621 = vmatmul.mubr.f32.gmra.mrb[0].mxu0 %v391
        %v1622 = vpop.f32.mrb[0].mxu0
        %v1623 = vadd.f32 %v1366, %v1622
        %v1624 = vpop.f32.mrb[0].mxu0
        %v1625 = vadd.f32 %v1368, %v1624
        %1626 = vmatprep.mubr.f32.mxu0 %v424
        %1627 = vmatmul.mubr.f32.gmra.mrb[0].mxu0 %v392
        %v1628 = vpop.f32.mrb[0].mxu0
        %v1629 = vadd.f32 %v1372, %v1628
        %v1630 = vpop.f32.mrb[0].mxu0
        %v1631 = vadd.f32 %v1374, %v1630
        %1632 = vmatprep.mubr.f32.mxu0 %v425
        %1633 = vmatmul.mubr.f32.gmra.mrb[0].mxu0 %v393
        %v1634 = vpop.f32.mrb[0].mxu0
        %v1635 = vadd.f32 %v1378, %v1634
        %v1636 = vpop.f32.mrb[0].mxu0
        %v1637 = vadd.f32 %v1380, %v1636
        %1638 = vmatprep.mubr.f32.mxu0 %v426
        %1639 = vmatmul.mubr.f32.gmra.mrb[0].mxu0 %v394
        %v1640 = vpop.f32.mrb[0].mxu0
        %v1641 = vadd.f32 %v1384, %v1640
        %v1642 = vpop.f32.mrb[0].mxu0
        %v1643 = vadd.f32 %v1386, %v1642
        %1644 = vmatprep.mubr.f32.mxu0 %v427
        %1645 = vmatmul.mubr.f32.gmra.mrb[0].mxu0 %v395
        %v1646 = vpop.f32.mrb[0].mxu0
        %v1647 = vadd.f32 %v1390, %v1646
        %v1648 = vpop.f32.mrb[0].mxu0
        %v1649 = vadd.f32 %v1392, %v1648
        %1650 = vmatprep.mubr.f32.mxu0 %v428
        %1651 = vmatmul.mubr.f32.gmra.mrb[0].mxu0 %v396
        %v1652 = vpop.f32.mrb[0].mxu0
        %v1653 = vadd.f32 %v1396, %v1652
        %v1654 = vpop.f32.mrb[0].mxu0
        %v1655 = vadd.f32 %v1398, %v1654
        %1656 = vmatprep.mubr.f32.mxu0 %v429
        %1657 = vmatmul.mubr.f32.gmra.mrb[0].mxu0 %v397
        %v1658 = vpop.f32.mrb[0].mxu0
        %v1659 = vadd.f32 %v1402, %v1658
        %v1660 = vpop.f32.mrb[0].mxu0
        %v1661 = vadd.f32 %v1404, %v1660
        %1662 = vmatprep.mubr.f32.mxu0 %v430
        %1663 = vmatmul.mubr.f32.gmra.mrb[0].mxu0 %v398
        %v1664 = vpop.f32.mrb[0].mxu0
        %v1665 = vadd.f32 %v1408, %v1664
        %v1666 = vpop.f32.mrb[0].mxu0
        %v1667 = vadd.f32 %v1410, %v1666
        %1668 = vmatprep.mubr.f32.mxu0 %v431
        %1669 = vmatmul.mubr.f32.gmra.mrb[0].mxu0 %v399
        %v1670 = vpop.f32.mrb[0].mxu0
        %v1671 = vadd.f32 %v1414, %v1670
        %v1672 = vpop.f32.mrb[0].mxu0
        %v1673 = vadd.f32 %v1416, %v1672
        %1674 = vmatprep.mubr.f32.mxu0 %v432
        %1675 = vmatmul.mubr.f32.gmra.mrb[0].mxu0 %v400
        %v1676 = vpop.f32.mrb[0].mxu0
        %v1677 = vadd.f32 %v1420, %v1676
        %v1678 = vpop.f32.mrb[0].mxu0
        %v1679 = vadd.f32 %v1422, %v1678
        %1680 = vmatprep.mubr.f32.mxu0 %v433
        %1681 = vmatmul.mubr.f32.gmra.mrb[0].mxu0 %v401
        %v1682 = vpop.f32.mrb[0].mxu0
        %v1683 = vadd.f32 %v1426, %v1682
        %v1684 = vpop.f32.mrb[0].mxu0
        %v1685 = vadd.f32 %v1428, %v1684
        %1686 = vmatprep.mubr.f32.mxu0 %v434
        %1687 = vmatmul.mubr.f32.gmra.mrb[0].mxu0 %v402
        %v1688 = vpop.f32.mrb[0].mxu0
        %v1689 = vadd.f32 %v1432, %v1688
        %v1690 = vpop.f32.mrb[0].mxu0
        %v1691 = vadd.f32 %v1434, %v1690
        %1692 = vmatprep.mubr.f32.mxu0 %v435
        %1693 = vmatmul.mubr.f32.gmra.mrb[0].mxu0 %v403
        %v1694 = vpop.f32.mrb[0].mxu0
        %v1695 = vadd.f32 %v1438, %v1694
        %v1696 = vpop.f32.mrb[0].mxu0
        %v1697 = vadd.f32 %v1440, %v1696
        %1698 = vmatprep.mubr.f32.mxu0 %v436
        %1699 = vmatmul.mubr.f32.gmra.mrb[0].mxu0 %v404
        %v1700 = vpop.f32.mrb[0].mxu0
        %v1701 = vadd.f32 %v1444, %v1700
        %v1702 = vpop.f32.mrb[0].mxu0
        %v1703 = vadd.f32 %v1446, %v1702
        %1704 = vmatprep.mubr.f32.mxu0 %v437
        %1705 = vmatmul.mubr.f32.gmra.mrb[0].mxu0 %v405
        %v1706 = vpop.f32.mrb[0].mxu0
        %v1707 = vadd.f32 %v1450, %v1706
        %v1708 = vpop.f32.mrb[0].mxu0
        %v1709 = vadd.f32 %v1452, %v1708
        %1710 = vmatprep.mubr.f32.mxu0 %v438
        %1711 = vmatmul.mubr.f32.gmra.mrb[0].mxu0 %v406
        %v1712 = vpop.f32.mrb[0].mxu0
        %v1713 = vadd.f32 %v1456, %v1712
        %v1714 = vpop.f32.mrb[0].mxu0
        %v1715 = vadd.f32 %v1458, %v1714
        %1716 = vmatprep.mubr.f32.mxu0 %v439
        %1717 = vmatmul.mubr.f32.gmra.mrb[0].mxu0 %v407
        %v1718 = vpop.f32.mrb[0].mxu0
        %v1719 = vadd.f32 %v1462, %v1718
        %v1720 = vpop.f32.mrb[0].mxu0
        %v1721 = vadd.f32 %v1464, %v1720
        %1722 = vmatprep.mubr.f32.mxu0 %v440
        %1723 = vmatmul.mubr.f32.gmra.mrb[0].mxu0 %v408
        %v1724 = vpop.f32.mrb[0].mxu0
        %v1725 = vadd.f32 %v1468, %v1724
        %v1726 = vpop.f32.mrb[0].mxu0
        %v1727 = vadd.f32 %v1470, %v1726
        %1728 = vmatprep.mubr.f32.mxu0 %v441
        %1729 = vmatmul.mubr.f32.gmra.mrb[0].mxu0 %v409
        %v1730 = vpop.f32.mrb[0].mxu0
        %v1731 = vadd.f32 %v1474, %v1730
        %v1732 = vpop.f32.mrb[0].mxu0
        %v1733 = vadd.f32 %v1476, %v1732
        %1734 = vmatprep.mubr.f32.mxu0 %v442
        %1735 = vmatmul.mubr.f32.gmra.mrb[0].mxu0 %v410
        %v1736 = vpop.f32.mrb[0].mxu0
        %v1737 = vadd.f32 %v1480, %v1736
        %v1738 = vpop.f32.mrb[0].mxu0
        %v1739 = vadd.f32 %v1482, %v1738
        %1740 = vmatprep.mubr.f32.mxu0 %v443
        %1741 = vmatmul.mubr.f32.gmra.mrb[0].mxu0 %v411
        %v1742 = vpop.f32.mrb[0].mxu0
        %v1743 = vadd.f32 %v1486, %v1742
        %v1744 = vpop.f32.mrb[0].mxu0
        %v1745 = vadd.f32 %v1488, %v1744
        %1746 = vmatprep.mubr.f32.mxu0 %v444
        %1747 = vmatmul.mubr.f32.gmra.mrb[0].mxu0 %v412
        %v1748 = vpop.f32.mrb[0].mxu0
        %v1749 = vadd.f32 %v1492, %v1748
        %v1750 = vpop.f32.mrb[0].mxu0
        %v1751 = vadd.f32 %v1494, %v1750
        %1752 = vmatprep.mubr.f32.mxu0 %v445
        %1753 = vmatmul.mubr.f32.gmra.mrb[0].mxu0 %v413
        %v1754 = vpop.f32.mrb[0].mxu0
        %v1755 = vadd.f32 %v1498, %v1754
        %v1756 = vpop.f32.mrb[0].mxu0
        %v1757 = vadd.f32 %v1500, %v1756
        %1758 = vmatprep.mubr.f32.mxu0 %v446
        %1759 = vmatmul.mubr.f32.gmra.mrb[0].mxu0 %v414
        %v1760 = vpop.f32.mrb[0].mxu0
        %v1761 = vadd.f32 %v1504, %v1760
        %v1762 = vpop.f32.mrb[0].mxu0
        %v1763 = vadd.f32 %v1506, %v1762
        %1764 = vmatprep.mubr.f32.mxu0 %v447
        %1765 = vmatmul.mubr.f32.gmra.mrb[0].mxu0 %v415
        %v1766 = vpop.f32.mrb[0].mxu0
        %v1767 = vadd.f32 %v1510, %v1766
        %v1768 = vpop.f32.mrb[0].mxu0
        %v1769 = vadd.f32 %v1512, %v1768
        %1770 = vmatprep.mubr.f32.mxu0 %v448
        %1771 = vmatmul.mubr.f32.gmra.mrb[0].mxu0 %v416
        %v1772 = vpop.f32.mrb[0].mxu0
        %v1773 = vadd.f32 %v1516, %v1772
        %v1774 = vpop.f32.mrb[0].mxu0
        %v1775 = vadd.f32 %v1518, %v1774
        %1776 = vmatprep.mubr.f32.mxu0 %v449
        %1777 = vmatmul.mubr.f32.gmra.mrb[0].mxu0 %v417
        %v1778 = vpop.f32.mrb[0].mxu0
        %v1779 = vadd.f32 %v1522, %v1778
        %v1780 = vpop.f32.mrb[0].mxu0
        %v1781 = vadd.f32 %v1524, %v1780
        %1782 = vmatprep.mubr.f32.mxu0 %v450
        %1783 = vmatmul.mubr.f32.gmra.mrb[0].mxu0 %v418
        %v1784 = vpop.f32.mrb[0].mxu0
        %v1785 = vadd.f32 %v1528, %v1784
        %v1786 = vpop.f32.mrb[0].mxu0
        %v1787 = vadd.f32 %v1530, %v1786
        %1788 = vmatprep.mubr.f32.mxu0 %v451
        %1789 = vmatmul.mubr.f32.gmra.mrb[0].mxu0 %v419
        %v1790 = vpop.f32.mrb[0].mxu0
        %v1791 = vadd.f32 %v1534, %v1790
        %v1792 = vpop.f32.mrb[0].mxu0
        %v1793 = vadd.f32 %v1536, %v1792
        %1794 = vmatprep.mubr.f32.mxu0 %v452
        %1795 = vmatmul.mubr.f32.gmra.mrb[0].mxu0 %v420
        %v1796 = vpop.f32.mrb[0].mxu0
        %v1797 = vadd.f32 %v1540, %v1796
        %v1798 = vpop.f32.mrb[0].mxu0
        %v1799 = vadd.f32 %v1542, %v1798
        %1800 = vdwg.mxu0
        %1801 = vmatprep.subr.mxu0 %v742
        %1802 = vmatpush1.msra.mxu0 %v741
        %1803 = vmatprep.subr.mxu0 %v744
        %1804 = vmatpush1.msra.mxu0 %v743
        %1805 = vmatprep.subr.mxu0 %v746
        %1806 = vmatpush1.msra.mxu0 %v745
        %1807 = vmatprep.subr.mxu0 %v748
        %1808 = vmatpush1.msra.mxu0 %v747
        %1809 = vmatprep.subr.mxu0 %v750
        %1810 = vmatpush1.msra.mxu0 %v749
        %1811 = vmatprep.subr.mxu0 %v752
        %1812 = vmatpush1.msra.mxu0 %v751
        %1813 = vmatprep.subr.mxu0 %v754
        %1814 = vmatpush1.msra.mxu0 %v753
        %1815 = vmatprep.subr.mxu0 %v756
        %1816 = vmatpush1.msra.mxu0 %v755
        %1817 = vmatprep.subr.mxu0 %v758
        %1818 = vmatpush1.msra.mxu0 %v757
        %1819 = vmatprep.subr.mxu0 %v760
        %1820 = vmatpush1.msra.mxu0 %v759
        %1821 = vmatprep.subr.mxu0 %v762
        %1822 = vmatpush1.msra.mxu0 %v761
        %1823 = vmatprep.subr.mxu0 %v764
        %1824 = vmatpush1.msra.mxu0 %v763
        %1825 = vmatprep.subr.mxu0 %v766
        %1826 = vmatpush1.msra.mxu0 %v765
        %1827 = vmatprep.subr.mxu0 %v768
        %1828 = vmatpush1.msra.mxu0 %v767
        %1829 = vmatprep.subr.mxu0 %v770
        %1830 = vmatpush1.msra.mxu0 %v769
        %1831 = vmatprep.subr.mxu0 %v772
        %1832 = vmatpush1.msra.mxu0 %v771
        %1833 = vmatprep.subr.mxu0 0.0
        %1834 = vmatpush1.msra.mxu0 0.0
        %1835 = vmatprep.subr.mxu0 0.0
        %1836 = vmatpush1.msra.mxu0 0.0
        %1837 = vmatprep.subr.mxu0 0.0
        %1838 = vmatpush1.msra.mxu0 0.0
        %1839 = vmatprep.subr.mxu0 0.0
        %1840 = vmatpush1.msra.mxu0 0.0
        %1841 = vmatprep.subr.mxu0 0.0
        %1842 = vmatpush1.msra.mxu0 0.0
        %1843 = vmatprep.subr.mxu0 0.0
        %1844 = vmatpush1.msra.mxu0 0.0
        %1845 = vmatprep.subr.mxu0 0.0
        %1846 = vmatpush1.msra.mxu0 0.0
        %1847 = vmatprep.subr.mxu0 0.0
        %1848 = vmatpush1.msra.mxu0 0.0
        %1849 = vmatprep.subr.mxu0 0.0
        %1850 = vmatpush1.msra.mxu0 0.0
        %1851 = vmatprep.subr.mxu0 0.0
        %1852 = vmatpush1.msra.mxu0 0.0
        %1853 = vmatprep.subr.mxu0 0.0
        %1854 = vmatpush1.msra.mxu0 0.0
        %1855 = vmatprep.subr.mxu0 0.0
        %1856 = vmatpush1.msra.mxu0 0.0
        %1857 = vmatprep.subr.mxu0 0.0
        %1858 = vmatpush1.msra.mxu0 0.0
        %1859 = vmatprep.subr.mxu0 0.0
        %1860 = vmatpush1.msra.mxu0 0.0
        %1861 = vmatprep.subr.mxu0 0.0
        %1862 = vmatpush1.msra.mxu0 0.0
        %1863 = vmatprep.subr.mxu0 0.0
        %1864 = vmatpush1.msra.mxu0 0.0
        %1865 = vmatprep.mubr.f32.mxu0 0.0
        %1866 = vmatmul.mubr.f32.gmra.mrb[0].mxu0 %v453
        %v1867 = vpop.f32.mrb[0].mxu0
        %v1868 = vadd.f32 %v1611, %v1867
        %v1869 = vpop.f32.mrb[0].mxu0
        %v1870 = vadd.f32 %v1613, %v1869
        %1871 = vmatprep.mubr.f32.mxu0 0.0
        %1872 = vmatmul.mubr.f32.gmra.mrb[0].mxu0 %v454
        %v1873 = vpop.f32.mrb[0].mxu0
        %v1874 = vadd.f32 %v1617, %v1873
        %v1875 = vpop.f32.mrb[0].mxu0
        %v1876 = vadd.f32 %v1619, %v1875
        %1877 = vmatprep.mubr.f32.mxu0 0.0
        %1878 = vmatmul.mubr.f32.gmra.mrb[0].mxu0 %v455
        %v1879 = vpop.f32.mrb[0].mxu0
        %v1880 = vadd.f32 %v1623, %v1879
        %v1881 = vpop.f32.mrb[0].mxu0
        %v1882 = vadd.f32 %v1625, %v1881
        %1883 = vmatprep.mubr.f32.mxu0 0.0
        %1884 = vmatmul.mubr.f32.gmra.mrb[0].mxu0 %v456
        %v1885 = vpop.f32.mrb[0].mxu0
        %v1886 = vadd.f32 %v1629, %v1885
        %v1887 = vpop.f32.mrb[0].mxu0
        %v1888 = vadd.f32 %v1631, %v1887
        %1889 = vmatprep.mubr.f32.mxu0 0.0
        %1890 = vmatmul.mubr.f32.gmra.mrb[0].mxu0 %v457
        %v1891 = vpop.f32.mrb[0].mxu0
        %v1892 = vadd.f32 %v1635, %v1891
        %v1893 = vpop.f32.mrb[0].mxu0
        %v1894 = vadd.f32 %v1637, %v1893
        %1895 = vmatprep.mubr.f32.mxu0 0.0
        %1896 = vmatmul.mubr.f32.gmra.mrb[0].mxu0 %v458
        %v1897 = vpop.f32.mrb[0].mxu0
        %v1898 = vadd.f32 %v1641, %v1897
        %v1899 = vpop.f32.mrb[0].mxu0
        %v1900 = vadd.f32 %v1643, %v1899
        %1901 = vmatprep.mubr.f32.mxu0 0.0
        %1902 = vmatmul.mubr.f32.gmra.mrb[0].mxu0 %v459
        %v1903 = vpop.f32.mrb[0].mxu0
        %v1904 = vadd.f32 %v1647, %v1903
        %v1905 = vpop.f32.mrb[0].mxu0
        %v1906 = vadd.f32 %v1649, %v1905
        %1907 = vmatprep.mubr.f32.mxu0 0.0
        %1908 = vmatmul.mubr.f32.gmra.mrb[0].mxu0 %v460
        %v1909 = vpop.f32.mrb[0].mxu0
        %v1910 = vadd.f32 %v1653, %v1909
        %v1911 = vpop.f32.mrb[0].mxu0
        %v1912 = vadd.f32 %v1655, %v1911
        %1913 = vmatprep.mubr.f32.mxu0 0.0
        %1914 = vmatmul.mubr.f32.gmra.mrb[0].mxu0 %v461
        %v1915 = vpop.f32.mrb[0].mxu0
        %v1916 = vadd.f32 %v1659, %v1915
        %v1917 = vpop.f32.mrb[0].mxu0
        %v1918 = vadd.f32 %v1661, %v1917
        %1919 = vmatprep.mubr.f32.mxu0 0.0
        %1920 = vmatmul.mubr.f32.gmra.mrb[0].mxu0 %v462
        %v1921 = vpop.f32.mrb[0].mxu0
        %v1922 = vadd.f32 %v1665, %v1921
        %v1923 = vpop.f32.mrb[0].mxu0
        %v1924 = vadd.f32 %v1667, %v1923
        %1925 = vmatprep.mubr.f32.mxu0 0.0
        %1926 = vmatmul.mubr.f32.gmra.mrb[0].mxu0 %v463
        %v1927 = vpop.f32.mrb[0].mxu0
        %v1928 = vadd.f32 %v1671, %v1927
        %v1929 = vpop.f32.mrb[0].mxu0
        %v1930 = vadd.f32 %v1673, %v1929
        %1931 = vmatprep.mubr.f32.mxu0 0.0
        %1932 = vmatmul.mubr.f32.gmra.mrb[0].mxu0 %v464
        %v1933 = vpop.f32.mrb[0].mxu0
        %v1934 = vadd.f32 %v1677, %v1933
        %v1935 = vpop.f32.mrb[0].mxu0
        %v1936 = vadd.f32 %v1679, %v1935
        %1937 = vmatprep.mubr.f32.mxu0 0.0
        %1938 = vmatmul.mubr.f32.gmra.mrb[0].mxu0 %v465
        %v1939 = vpop.f32.mrb[0].mxu0
        %v1940 = vadd.f32 %v1683, %v1939
        %v1941 = vpop.f32.mrb[0].mxu0
        %v1942 = vadd.f32 %v1685, %v1941
        %1943 = vmatprep.mubr.f32.mxu0 0.0
        %1944 = vmatmul.mubr.f32.gmra.mrb[0].mxu0 %v466
        %v1945 = vpop.f32.mrb[0].mxu0
        %v1946 = vadd.f32 %v1689, %v1945
        %v1947 = vpop.f32.mrb[0].mxu0
        %v1948 = vadd.f32 %v1691, %v1947
        %1949 = vmatprep.mubr.f32.mxu0 0.0
        %1950 = vmatmul.mubr.f32.gmra.mrb[0].mxu0 %v467
        %v1951 = vpop.f32.mrb[0].mxu0
        %v1952 = vadd.f32 %v1695, %v1951
        %v1953 = vpop.f32.mrb[0].mxu0
        %v1954 = vadd.f32 %v1697, %v1953
        %1955 = vmatprep.mubr.f32.mxu0 0.0
        %1956 = vmatmul.mubr.f32.gmra.mrb[0].mxu0 %v468
        %v1957 = vpop.f32.mrb[0].mxu0
        %v1958 = vadd.f32 %v1701, %v1957
        %v1959 = vpop.f32.mrb[0].mxu0
        %v1960 = vadd.f32 %v1703, %v1959
        %1961 = vmatprep.mubr.f32.mxu0 0.0
        %1962 = vmatmul.mubr.f32.gmra.mrb[0].mxu0 %v469
        %v1963 = vpop.f32.mrb[0].mxu0
        %v1964 = vadd.f32 %v1707, %v1963
        %v1965 = vpop.f32.mrb[0].mxu0
        %v1966 = vadd.f32 %v1709, %v1965
        %1967 = vmatprep.mubr.f32.mxu0 0.0
        %1968 = vmatmul.mubr.f32.gmra.mrb[0].mxu0 %v470
        %v1969 = vpop.f32.mrb[0].mxu0
        %v1970 = vadd.f32 %v1713, %v1969
        %v1971 = vpop.f32.mrb[0].mxu0
        %v1972 = vadd.f32 %v1715, %v1971
        %1973 = vmatprep.mubr.f32.mxu0 0.0
        %1974 = vmatmul.mubr.f32.gmra.mrb[0].mxu0 %v471
        %v1975 = vpop.f32.mrb[0].mxu0
        %v1976 = vadd.f32 %v1719, %v1975
        %v1977 = vpop.f32.mrb[0].mxu0
        %v1978 = vadd.f32 %v1721, %v1977
        %1979 = vmatprep.mubr.f32.mxu0 0.0
        %1980 = vmatmul.mubr.f32.gmra.mrb[0].mxu0 %v472
        %v1981 = vpop.f32.mrb[0].mxu0
        %v1982 = vadd.f32 %v1725, %v1981
        %v1983 = vpop.f32.mrb[0].mxu0
        %v1984 = vadd.f32 %v1727, %v1983
        %1985 = vmatprep.mubr.f32.mxu0 0.0
        %1986 = vmatmul.mubr.f32.gmra.mrb[0].mxu0 %v473
        %v1987 = vpop.f32.mrb[0].mxu0
        %v1988 = vadd.f32 %v1731, %v1987
        %v1989 = vpop.f32.mrb[0].mxu0
        %v1990 = vadd.f32 %v1733, %v1989
        %1991 = vmatprep.mubr.f32.mxu0 0.0
        %1992 = vmatmul.mubr.f32.gmra.mrb[0].mxu0 %v474
        %v1993 = vpop.f32.mrb[0].mxu0
        %v1994 = vadd.f32 %v1737, %v1993
        %v1995 = vpop.f32.mrb[0].mxu0
        %v1996 = vadd.f32 %v1739, %v1995
        %1997 = vmatprep.mubr.f32.mxu0 0.0
        %1998 = vmatmul.mubr.f32.gmra.mrb[0].mxu0 %v475
        %v1999 = vpop.f32.mrb[0].mxu0
        %v2000 = vadd.f32 %v1743, %v1999
        %v2001 = vpop.f32.mrb[0].mxu0
        %v2002 = vadd.f32 %v1745, %v2001
        %2003 = vmatprep.mubr.f32.mxu0 0.0
        %2004 = vmatmul.mubr.f32.gmra.mrb[0].mxu0 %v476
        %v2005 = vpop.f32.mrb[0].mxu0
        %v2006 = vadd.f32 %v1749, %v2005
        %v2007 = vpop.f32.mrb[0].mxu0
        %v2008 = vadd.f32 %v1751, %v2007
        %2009 = vmatprep.mubr.f32.mxu0 0.0
        %2010 = vmatmul.mubr.f32.gmra.mrb[0].mxu0 %v477
        %v2011 = vpop.f32.mrb[0].mxu0
        %v2012 = vadd.f32 %v1755, %v2011
        %v2013 = vpop.f32.mrb[0].mxu0
        %v2014 = vadd.f32 %v1757, %v2013
        %2015 = vmatprep.mubr.f32.mxu0 0.0
        %2016 = vmatmul.mubr.f32.gmra.mrb[0].mxu0 %v478
        %v2017 = vpop.f32.mrb[0].mxu0
        %v2018 = vadd.f32 %v1761, %v2017
        %v2019 = vpop.f32.mrb[0].mxu0
        %v2020 = vadd.f32 %v1763, %v2019
        %2021 = vmatprep.mubr.f32.mxu0 0.0
        %2022 = vmatmul.mubr.f32.gmra.mrb[0].mxu0 %v479
        %v2023 = vpop.f32.mrb[0].mxu0
        %v2024 = vadd.f32 %v1767, %v2023
        %v2025 = vpop.f32.mrb[0].mxu0
        %v2026 = vadd.f32 %v1769, %v2025
        %2027 = vmatprep.mubr.f32.mxu0 0.0
        %2028 = vmatmul.mubr.f32.gmra.mrb[0].mxu0 %v480
        %v2029 = vpop.f32.mrb[0].mxu0
        %v2030 = vadd.f32 %v1773, %v2029
        %v2031 = vpop.f32.mrb[0].mxu0
        %v2032 = vadd.f32 %v1775, %v2031
        %2033 = vmatprep.mubr.f32.mxu0 0.0
        %2034 = vmatmul.mubr.f32.gmra.mrb[0].mxu0 %v481
        %v2035 = vpop.f32.mrb[0].mxu0
        %v2036 = vadd.f32 %v1779, %v2035
        %v2037 = vpop.f32.mrb[0].mxu0
        %v2038 = vadd.f32 %v1781, %v2037
        %2039 = vmatprep.mubr.f32.mxu0 0.0
        %2040 = vmatmul.mubr.f32.gmra.mrb[0].mxu0 %v482
        %v2041 = vpop.f32.mrb[0].mxu0
        %v2042 = vadd.f32 %v1785, %v2041
        %v2043 = vpop.f32.mrb[0].mxu0
        %v2044 = vadd.f32 %v1787, %v2043
        %2045 = vmatprep.mubr.f32.mxu0 0.0
        %2046 = vmatmul.mubr.f32.gmra.mrb[0].mxu0 %v483
        %v2047 = vpop.f32.mrb[0].mxu0
        %v2048 = vadd.f32 %v1791, %v2047
        %v2049 = vpop.f32.mrb[0].mxu0
        %v2050 = vadd.f32 %v1793, %v2049
        %2051 = vmatprep.mubr.f32.mxu0 0.0
        %2052 = vmatmul.mubr.f32.gmra.mrb[0].mxu0 %v484
        %v2053 = vpop.f32.mrb[0].mxu0
        %v2054 = vadd.f32 %v1797, %v2053
        %v2055 = vpop.f32.mrb[0].mxu0
        %v2056 = vadd.f32 %v1799, %v2055
        %2057 = vdwg.mxu0
        %2058 = vst [vmem:[%s182] sm:$0xff] %v1868
        %2059 = vst [vmem:[%s182 + $0x8] sm:$0xff] %v1870
        %2060 = vst [vmem:[%s182 + $0x10] sm:$0xff] %v1874
        %2061 = vst [vmem:[%s182 + $0x18] sm:$0xff] %v1876
        %2062 = vst [vmem:[%s182 + $0x20] sm:$0xff] %v1880
        %2063 = vst [vmem:[%s182 + $0x28] sm:$0xff] %v1882
        %2064 = vst [vmem:[%s182 + $0x30] sm:$0xff] %v1886
        %2065 = vst [vmem:[%s182 + $0x38] sm:$0xff] %v1888
        %2066 = vst [vmem:[%s182 + $0x40] sm:$0xff] %v1892
        %2067 = vst [vmem:[%s182 + $0x48] sm:$0xff] %v1894
        %2068 = vst [vmem:[%s182 + $0x50] sm:$0xff] %v1898
        %2069 = vst [vmem:[%s182 + $0x58] sm:$0xff] %v1900
        %2070 = vst [vmem:[%s182 + $0x60] sm:$0xff] %v1904
        %2071 = vst [vmem:[%s182 + $0x68] sm:$0xff] %v1906
        %2072 = vst [vmem:[%s182 + $0x70] sm:$0xff] %v1910
        %2073 = vst [vmem:[%s182 + $0x78] sm:$0xff] %v1912
        %2074 = vst [vmem:[%s182 + $0x80] sm:$0xff] %v1916
        %2075 = vst [vmem:[%s182 + $0x88] sm:$0xff] %v1918
        %2076 = vst [vmem:[%s182 + $0x90] sm:$0xff] %v1922
        %2077 = vst [vmem:[%s182 + $0x98] sm:$0xff] %v1924
        %2078 = vst [vmem:[%s182 + $0xa0] sm:$0xff] %v1928
        %2079 = vst [vmem:[%s182 + $0xa8] sm:$0xff] %v1930
        %2080 = vst [vmem:[%s182 + $0xb0] sm:$0xff] %v1934
        %2081 = vst [vmem:[%s182 + $0xb8] sm:$0xff] %v1936
        %2082 = vst [vmem:[%s182 + $0xc0] sm:$0xff] %v1940
        %2083 = vst [vmem:[%s182 + $0xc8] sm:$0xff] %v1942
        %2084 = vst [vmem:[%s182 + $0xd0] sm:$0xff] %v1946
        %2085 = vst [vmem:[%s182 + $0xd8] sm:$0xff] %v1948
        %2086 = vst [vmem:[%s182 + $0xe0] sm:$0xff] %v1952
        %2087 = vst [vmem:[%s182 + $0xe8] sm:$0xff] %v1954
        %2088 = vst [vmem:[%s182 + $0xf0] sm:$0xff] %v1958
        %2089 = vst [vmem:[%s182 + $0xf8] sm:$0xff] %v1960
        %2090 = vst [vmem:[%s182 + $0x100] sm:$0xff] %v1964
        %2091 = vst [vmem:[%s182 + $0x108] sm:$0xff] %v1966
        %2092 = vst [vmem:[%s182 + $0x110] sm:$0xff] %v1970
        %2093 = vst [vmem:[%s182 + $0x118] sm:$0xff] %v1972
        %2094 = vst [vmem:[%s182 + $0x120] sm:$0xff] %v1976
        %2095 = vst [vmem:[%s182 + $0x128] sm:$0xff] %v1978
        %2096 = vst [vmem:[%s182 + $0x130] sm:$0xff] %v1982
        %2097 = vst [vmem:[%s182 + $0x138] sm:$0xff] %v1984
        %2098 = vst [vmem:[%s182 + $0x140] sm:$0xff] %v1988
        %2099 = vst [vmem:[%s182 + $0x148] sm:$0xff] %v1990
        %2100 = vst [vmem:[%s182 + $0x150] sm:$0xff] %v1994
        %2101 = vst [vmem:[%s182 + $0x158] sm:$0xff] %v1996
        %2102 = vst [vmem:[%s182 + $0x160] sm:$0xff] %v2000
        %2103 = vst [vmem:[%s182 + $0x168] sm:$0xff] %v2002
        %2104 = vst [vmem:[%s182 + $0x170] sm:$0xff] %v2006
        %2105 = vst [vmem:[%s182 + $0x178] sm:$0xff] %v2008
        %2106 = vst [vmem:[%s182 + $0x180] sm:$0xff] %v2012
        %2107 = vst [vmem:[%s182 + $0x188] sm:$0xff] %v2014
        %2108 = vst [vmem:[%s182 + $0x190] sm:$0xff] %v2018
        %2109 = vst [vmem:[%s182 + $0x198] sm:$0xff] %v2020
        %2110 = vst [vmem:[%s182 + $0x1a0] sm:$0xff] %v2024
        %2111 = vst [vmem:[%s182 + $0x1a8] sm:$0xff] %v2026
        %2112 = vst [vmem:[%s182 + $0x1b0] sm:$0xff] %v2030
        %2113 = vst [vmem:[%s182 + $0x1b8] sm:$0xff] %v2032
        %2114 = vst [vmem:[%s182 + $0x1c0] sm:$0xff] %v2036
        %2115 = vst [vmem:[%s182 + $0x1c8] sm:$0xff] %v2038
        %2116 = vst [vmem:[%s182 + $0x1d0] sm:$0xff] %v2042
        %2117 = vst [vmem:[%s182 + $0x1d8] sm:$0xff] %v2044
        %2118 = vst [vmem:[%s182 + $0x1e0] sm:$0xff] %v2048
        %2119 = vst [vmem:[%s182 + $0x1e8] sm:$0xff] %v2050
        %2120 = vst [vmem:[%s182 + $0x1f0] sm:$0xff] %v2054
        %2121 = vst [vmem:[%s182 + $0x1f8] sm:$0xff] %v2056
        %2122 = vmatprep.subr.mxu0 0.0
        %2123 = vmatpush1.msra.mxu0 %v1868
        %2124 = vmatprep.subr.mxu0 0.0
        %2125 = vmatpush1.msra.mxu0 %v1874
        %2126 = vmatprep.subr.mxu0 0.0
        %2127 = vmatpush1.msra.mxu0 %v1880
        %2128 = vmatprep.subr.mxu0 0.0
        %2129 = vmatpush1.msra.mxu0 %v1886
        %2130 = vmatprep.subr.mxu0 0.0
        %2131 = vmatpush1.msra.mxu0 %v1892
        %2132 = vmatprep.subr.mxu0 0.0
        %2133 = vmatpush1.msra.mxu0 %v1898
        %2134 = vmatprep.subr.mxu0 0.0
        %2135 = vmatpush1.msra.mxu0 %v1904
        %2136 = vmatprep.subr.mxu0 0.0
        %2137 = vmatpush1.msra.mxu0 %v1910
        %2138 = vmatprep.subr.mxu0 0.0
        %2139 = vmatpush1.msra.mxu0 %v1916
        %2140 = vmatprep.subr.mxu0 0.0
        %2141 = vmatpush1.msra.mxu0 %v1922
        %2142 = vmatprep.subr.mxu0 0.0
        %2143 = vmatpush1.msra.mxu0 %v1928
        %2144 = vmatprep.subr.mxu0 0.0
        %2145 = vmatpush1.msra.mxu0 %v1934
        %2146 = vmatprep.subr.mxu0 0.0
        %2147 = vmatpush1.msra.mxu0 %v1940
        %2148 = vmatprep.subr.mxu0 0.0
        %2149 = vmatpush1.msra.mxu0 %v1946
        %2150 = vmatprep.subr.mxu0 0.0
        %2151 = vmatpush1.msra.mxu0 %v1952
        %2152 = vmatprep.subr.mxu0 0.0
        %2153 = vmatpush1.msra.mxu0 %v1958
        %2154 = vmatprep.subr.mxu0 0.0
        %2155 = vmatpush1.msra.mxu0 %v1964
        %2156 = vmatprep.subr.mxu0 0.0
        %2157 = vmatpush1.msra.mxu0 %v1970
        %2158 = vmatprep.subr.mxu0 0.0
        %2159 = vmatpush1.msra.mxu0 %v1976
        %2160 = vmatprep.subr.mxu0 0.0
        %2161 = vmatpush1.msra.mxu0 %v1982
        %2162 = vmatprep.subr.mxu0 0.0
        %2163 = vmatpush1.msra.mxu0 %v1988
        %2164 = vmatprep.subr.mxu0 0.0
        %2165 = vmatpush1.msra.mxu0 %v1994
        %2166 = vmatprep.subr.mxu0 0.0
        %2167 = vmatpush1.msra.mxu0 %v2000
        %2168 = vmatprep.subr.mxu0 0.0
        %2169 = vmatpush1.msra.mxu0 %v2006
        %2170 = vmatprep.subr.mxu0 0.0
        %2171 = vmatpush1.msra.mxu0 %v2012
        %2172 = vmatprep.subr.mxu0 0.0
        %2173 = vmatpush1.msra.mxu0 %v2018
        %2174 = vmatprep.subr.mxu0 0.0
        %2175 = vmatpush1.msra.mxu0 %v2024
        %2176 = vmatprep.subr.mxu0 0.0
        %2177 = vmatpush1.msra.mxu0 %v2030
        %2178 = vmatprep.subr.mxu0 0.0
        %2179 = vmatpush1.msra.mxu0 %v2036
        %2180 = vmatprep.subr.mxu0 0.0
        %2181 = vmatpush1.msra.mxu0 %v2042
        %2182 = vmatprep.subr.mxu0 0.0
        %2183 = vmatpush1.msra.mxu0 %v2048
        %2184 = vmatprep.subr.mxu0 0.0
        %2185 = vmatpush1.msra.mxu0 %v2054
        %2186 = vmatprep.mubr.f32.mxu0 1.0
        %2187 = vmatmul.mubr.f32.gmra.mrb[0].mxu0 1.0
        %v2188 = vpop.f32.mrb[0].mxu0
        %v2189 = vadd.f32 0.0, %v2188
        %v2190 = vpop.f32.mrb[0].mxu0
        %2191 = vdwg.mxu0
        %v2192 = vmul.f32 %v1868, %v1868
        %v2193 = vmul.f32 %v1874, %v1874
        %v2194 = vmul.f32 %v1880, %v1880
        %v2195 = vmul.f32 %v1886, %v1886
        %v2196 = vmul.f32 %v1892, %v1892
        %v2197 = vmul.f32 %v1898, %v1898
        %v2198 = vmul.f32 %v1904, %v1904
        %v2199 = vmul.f32 %v1910, %v1910
        %v2200 = vmul.f32 %v1916, %v1916
        %v2201 = vmul.f32 %v1922, %v1922
        %v2202 = vmul.f32 %v1928, %v1928
        %v2203 = vmul.f32 %v1934, %v1934
        %v2204 = vmul.f32 %v1940, %v1940
        %v2205 = vmul.f32 %v1946, %v1946
        %v2206 = vmul.f32 %v1952, %v1952
        %v2207 = vmul.f32 %v1958, %v1958
        %v2208 = vmul.f32 %v1964, %v1964
        %v2209 = vmul.f32 %v1970, %v1970
        %v2210 = vmul.f32 %v1976, %v1976
        %v2211 = vmul.f32 %v1982, %v1982
        %v2212 = vmul.f32 %v1988, %v1988
        %v2213 = vmul.f32 %v1994, %v1994
        %v2214 = vmul.f32 %v2000, %v2000
        %v2215 = vmul.f32 %v2006, %v2006
        %v2216 = vmul.f32 %v2012, %v2012
        %v2217 = vmul.f32 %v2018, %v2018
        %v2218 = vmul.f32 %v2024, %v2024
        %v2219 = vmul.f32 %v2030, %v2030
        %v2220 = vmul.f32 %v2036, %v2036
        %v2221 = vmul.f32 %v2042, %v2042
        %v2222 = vmul.f32 %v2048, %v2048
        %v2223 = vmul.f32 %v2054, %v2054
        %2224 = vmatprep.subr.mxu0 0.0
        %2225 = vmatpush1.msra.mxu0 %v2192
        %2226 = vmatprep.subr.mxu0 0.0
        %2227 = vmatpush1.msra.mxu0 %v2193
        %2228 = vmatprep.subr.mxu0 0.0
        %2229 = vmatpush1.msra.mxu0 %v2194
        %2230 = vmatprep.subr.mxu0 0.0
        %2231 = vmatpush1.msra.mxu0 %v2195
        %2232 = vmatprep.subr.mxu0 0.0
        %2233 = vmatpush1.msra.mxu0 %v2196
        %2234 = vmatprep.subr.mxu0 0.0
        %2235 = vmatpush1.msra.mxu0 %v2197
        %2236 = vmatprep.subr.mxu0 0.0
        %2237 = vmatpush1.msra.mxu0 %v2198
        %2238 = vmatprep.subr.mxu0 0.0
        %2239 = vmatpush1.msra.mxu0 %v2199
        %2240 = vmatprep.subr.mxu0 0.0
        %2241 = vmatpush1.msra.mxu0 %v2200
        %2242 = vmatprep.subr.mxu0 0.0
        %2243 = vmatpush1.msra.mxu0 %v2201
        %2244 = vmatprep.subr.mxu0 0.0
        %2245 = vmatpush1.msra.mxu0 %v2202
        %2246 = vmatprep.subr.mxu0 0.0
        %2247 = vmatpush1.msra.mxu0 %v2203
        %2248 = vmatprep.subr.mxu0 0.0
        %2249 = vmatpush1.msra.mxu0 %v2204
        %2250 = vmatprep.subr.mxu0 0.0
        %2251 = vmatpush1.msra.mxu0 %v2205
        %2252 = vmatprep.subr.mxu0 0.0
        %2253 = vmatpush1.msra.mxu0 %v2206
        %2254 = vmatprep.subr.mxu0 0.0
        %2255 = vmatpush1.msra.mxu0 %v2207
        %2256 = vmatprep.subr.mxu0 0.0
        %2257 = vmatpush1.msra.mxu0 %v2208
        %2258 = vmatprep.subr.mxu0 0.0
        %2259 = vmatpush1.msra.mxu0 %v2209
        %2260 = vmatprep.subr.mxu0 0.0
        %2261 = vmatpush1.msra.mxu0 %v2210
        %2262 = vmatprep.subr.mxu0 0.0
        %2263 = vmatpush1.msra.mxu0 %v2211
        %2264 = vmatprep.subr.mxu0 0.0
        %2265 = vmatpush1.msra.mxu0 %v2212
        %2266 = vmatprep.subr.mxu0 0.0
        %2267 = vmatpush1.msra.mxu0 %v2213
        %2268 = vmatprep.subr.mxu0 0.0
        %2269 = vmatpush1.msra.mxu0 %v2214
        %2270 = vmatprep.subr.mxu0 0.0
        %2271 = vmatpush1.msra.mxu0 %v2215
        %2272 = vmatprep.subr.mxu0 0.0
        %2273 = vmatpush1.msra.mxu0 %v2216
        %2274 = vmatprep.subr.mxu0 0.0
        %2275 = vmatpush1.msra.mxu0 %v2217
        %2276 = vmatprep.subr.mxu0 0.0
        %2277 = vmatpush1.msra.mxu0 %v2218
        %2278 = vmatprep.subr.mxu0 0.0
        %2279 = vmatpush1.msra.mxu0 %v2219
        %2280 = vmatprep.subr.mxu0 0.0
        %2281 = vmatpush1.msra.mxu0 %v2220
        %2282 = vmatprep.subr.mxu0 0.0
        %2283 = vmatpush1.msra.mxu0 %v2221
        %2284 = vmatprep.subr.mxu0 0.0
        %2285 = vmatpush1.msra.mxu0 %v2222
        %2286 = vmatprep.subr.mxu0 0.0
        %2287 = vmatpush1.msra.mxu0 %v2223
        %2288 = vmatprep.mubr.f32.mxu0 1.0
        %2289 = vmatmul.mubr.f32.gmra.mrb[0].mxu0 1.0
        %v2290 = vpop.f32.mrb[0].mxu0
        %v2291 = vadd.f32 0.0, %v2290
        %v2292 = vpop.f32.mrb[0].mxu0
        %2293 = vdwg.mxu0
        %v2295 = vrot.slane %v2291, 7
        %vm2297 = vcmask 1040384
        %v2298 = vsel %vm2297, %v2189, %v2295
        %2299 = vst [vmem:[%s189] sm:$0x3] %v2298
        %s2300 = sand.u32 %s77, 1
        %s2301 = scalar_lea.sflag [#allocation4], %s2300
        %s2302 = sand.u32 %s77, 1
        %s2303 = smul.addr %s2302, 512
        %s2304 = scalar_lea.vmem [#allocation5], %s2303
        %s2305 = sand.u32 %s103, 1
        %s2306 = scalar_lea.sflag [#allocation7], %s2305
        %s2307 = sand.u32 %s103, 1
        %s2308 = smul.addr %s2307, 2
        %s2309 = scalar_lea.vmem [#allocation6], %s2308
        // Predicated region
        $region33: #{tpu_custom_call.1} parent=27 // pred_check
          %p2310 = pneg %p87
        $region34: #{tpu_custom_call.1} parent=27 // pred_check_branch
          %2312 = sbr.rel (%p2310) target = $region36
        $region35: #{tpu_custom_call.1} parent=27 // pred_region
          %s2314 = ssub.s32 8192, 8192
          %2315 = vsyncadd %s2301, %s2314
          %s2316 = smul.addr %s22, 64
          %s2317 = smul.addr %s2316, 128
          %s2318 = scalar_lea.hbm %s2, %s2317
          %s2319 = sshll.u32 %s2304, 4
          %s2320 = int_to_ptr.vmem [resolvable:$true] %s2319
          %2325 = dma.vmem_to_hbm [thread:$0]  %s2320, 8192, %s2318, %s2301, 256, 256, 16
        $region36: #{tpu_custom_call.1} parent=27 // pred_fallthru
          _
        // Predicated region
        $region37: #{tpu_custom_call.1} parent=27 // pred_check
          %p2326 = pneg %p113
        $region38: #{tpu_custom_call.1} parent=27 // pred_check_branch
          %2328 = sbr.rel (%p2326) target = $region40
        $region39: #{tpu_custom_call.1} parent=27 // pred_region
          %s2330 = ssub.s32 32, 32
          %2331 = vsyncadd %s2306, %s2330
          %s2332 = smul.addr %s22, 32
          %s2333 = scalar_lea.hbm %s3, %s2332
          %s2335 = sshll.u32 %s2309, 4
          %s2336 = int_to_ptr.vmem [resolvable:$true] %s2335
          %2338 = dma.vmem_to_hbm [thread:$0]  %s2336, 32, %s2333, %s2306
        $region40: #{tpu_custom_call.1} parent=27 // pred_fallthru
          _
      $region28: #{tpu_custom_call.1} parent=5 // pred_fallthru
        _
      %p2339 = scmp.le.s32.totalorder 2, %s17
      // Predicated region
      $region41: #{tpu_custom_call.1} parent=5 // pred_check
        %p2340 = pneg %p2339
      $region42: #{tpu_custom_call.1} parent=5 // pred_check_branch
        %2342 = sbr.rel (%p2340) target = $region44
      $region43: #{tpu_custom_call.1} parent=5 // pred_region
        %s2343 = ssub.s32 %s17, 2
        // Predicated region
        $region45: #{tpu_custom_call.1} parent=43 // pred_check
          %p2344 = pneg %p93
        $region46: #{tpu_custom_call.1} parent=43 // pred_check_branch
          %2346 = sbr.rel (%p2344) target = $region48
        $region47: #{tpu_custom_call.1} parent=43 // pred_region
          %s2347 = sand.u32 %s78, 1
          %s2348 = scalar_lea.sflag [#allocation4], %s2347
          %s2349 = sand.u32 %s78, 1
          %s2350 = smul.addr %s2349, 512
          %s2351 = scalar_lea.vmem [#allocation5], %s2350
          %2352 = dma.done %s2348, 8192
        $region48: #{tpu_custom_call.1} parent=43 // pred_fallthru
          _
        // Predicated region
        $region49: #{tpu_custom_call.1} parent=43 // pred_check
          %p2353 = pneg %p119
        $region50: #{tpu_custom_call.1} parent=43 // pred_check_branch
          %2355 = sbr.rel (%p2353) target = $region52
        $region51: #{tpu_custom_call.1} parent=43 // pred_region
          %s2356 = sand.u32 %s104, 1
          %s2357 = scalar_lea.sflag [#allocation7], %s2356
          %s2358 = sand.u32 %s104, 1
          %s2359 = smul.addr %s2358, 2
          %s2360 = scalar_lea.vmem [#allocation6], %s2359
          %2361 = dma.done %s2357, 32
        $region52: #{tpu_custom_call.1} parent=43 // pred_fallthru
          _
      $region44: #{tpu_custom_call.1} parent=5 // pred_fallthru
        _
    $region6: #{tpu_custom_call.1} parent=1 // loop_footer
      %s21 = sadd.s32 1, %s17
    $region7: #{tpu_custom_call.1} parent=1 // loop_footer_branch
      %16 = sbr.rel target = $region3
    $region8: #{tpu_custom_call.1} parent=1 // loop_exit
      _
    %2362 = vsyncpa [#allocation3], 1
    %s2363 = scalar_lea.sflag [#allocation3], 1
    %2364 = vsyncpa %s2363, 1
    %2365 = vsyncpa [#allocation4], 1
    %s2366 = scalar_lea.sflag [#allocation4], 1
    %2367 = vsyncpa %s2366, 1
    %2368 = vsyncpa [#allocation7], 1
    %s2369 = scalar_lea.sflag [#allocation7], 1
    %2370 = vsyncpa %s2369, 1

</llo_original>
